<compile_context>
chip_gen: v6e
topology: v6e:2x2x1
jax: 0.10.0
libtpu: 0.0.40
codegen_flags: <defaults>
</compile_context>

<pallas_src>
import functools

import jax
import jax.numpy as jnp
from jax.experimental import pallas as pl
from jax.experimental.pallas import tpu as pltpu

_SUBLANE = 8
_LANE = 128


def _round_up(x, m):
    return ((x + m - 1) // m) * m


def _fc_gru_kernel(
    x_ref,              # (T*Bp, Din)   time-major, batch-padded, flattened
    w1_ref, b1_ref,     # fc1: (Din, H), (1, H)
    wih_ref, bi_ref,    # GRU input side:  (H, 3H) = [Wir|Wiz|Win], (1, 3H) folded bias
    whh_ref, bhn_ref,   # GRU hidden side: (H, 3H) = [Whr|Whz|Whn], (1, H) = b_hn
    w2_ref, b2_ref,     # fc2: (H, H), (1, H)
    w3_ref, b3_ref,     # fc3: (H, Np), (1, Np)   lane-padded to 128
    out_ref,            # (T*Bp, Np)
    *, T, Bp, H,
):
    # ---------- hoisted, non-recurrent compute (big-M GEMMs) ----------
    x = x_ref[...]                                                    # (T*Bp, Din)

    a = jnp.dot(x, w1_ref[...], preferred_element_type=jnp.float32)
    a = jnp.maximum(a + b1_ref[...], 0.0)                             # (T*Bp, H)

    gi = jnp.dot(a, wih_ref[...], preferred_element_type=jnp.float32)
    gi = gi + bi_ref[...]                                             # (T*Bp, 3H)

    # Hoist loop-invariant slicing / broadcasts out of the unrolled loop
    # (JAX does not CSE broadcast_in_dim; lane slicing repeats otherwise).
    gi_r = gi[:, 0 * H:1 * H]
    gi_z = gi[:, 1 * H:2 * H]
    gi_n = gi[:, 2 * H:3 * H]
    whh = whh_ref[...]                                                # (H, 3H)
    bhn_b = jnp.broadcast_to(bhn_ref[...], (Bp, H))                   # (Bp, H)

    # ---------- sequential GRU recurrence (fully unrolled) ----------
    # Single (Bp, H) @ (H, 3H) matmul per step on the critical path.
    h = jnp.zeros((Bp, H), jnp.float32)        # PyTorch default h0 = 0
    h_steps = []
    for t in range(T):
        lo = t * Bp
        hi = lo + Bp
        gh = jnp.dot(h, whh, preferred_element_type=jnp.float32)      # (Bp, 3H)

        r = jax.nn.sigmoid(gi_r[lo:hi, :] + gh[:, 0 * H:1 * H])
        z = jax.nn.sigmoid(gi_z[lo:hi, :] + gh[:, 1 * H:2 * H])
        n = jnp.tanh(gi_n[lo:hi, :] + r * (gh[:, 2 * H:3 * H] + bhn_b))
        h = n + z * (h - n)                    # == (1-z)*n + z*h, one fewer VALU op
        h_steps.append(h)

    # No VMEM scratch round-trip: stitch the (<= 8 vregs of) hidden state once.
    hseq = jnp.concatenate(h_steps, axis=0)                           # (T*Bp, H)

    # ---------- hoisted post-recurrence compute ----------
    f2 = jnp.dot(hseq, w2_ref[...], preferred_element_type=jnp.float32)
    f2 = jnp.maximum(f2 + b2_ref[...], 0.0)                           # (T*Bp, H)

    y = jnp.dot(f2, w3_ref[...], preferred_element_type=jnp.float32)
    out_ref[...] = y + b3_ref[...]             # single lane-dense (128-wide) store


def fc_with_gru_forward(x, params):
    """x: (B, T, num_in) float32 (PyTorch batch_first convention)."""
    B, T, Din = x.shape
    H = params["w1"].shape[1]
    Dout = params["w3"].shape[1]

    # Pad batch to one full sublane tile so per-step slices are whole tiles.
    Bp = _round_up(B, _SUBLANE)
    x_pad = jnp.pad(x, ((0, Bp - B), (0, 0), (0, 0)))

    # time-major, flattened: (T*Bp, Din)
    x_flat = jnp.transpose(x_pad, (1, 0, 2)).reshape(T * Bp, Din)

    # Lane-pad fc3 so the final store is unmasked 128-lane-dense.
    Np = _round_up(Dout, _LANE)
    w3p = jnp.pad(params["w3"], ((0, 0), (0, Np - Dout)))
    b3p = jnp.pad(params["b3"], ((0, 0), (0, Np - Dout)))

    inputs = (
        x_flat,
        params["w1"], params["b1"],
        params["wih"], params["bi"],
        params["whh"], params["bhn"],
        params["w2"], params["b2"],
        w3p, b3p,
    )

    vmem_spec = pl.BlockSpec(memory_space=pltpu.MemorySpace.VMEM)
    kernel = functools.partial(_fc_gru_kernel, T=T, Bp=Bp, H=H)

    # TODO(synk): if T/B/H scale up, add a grid over B-chunks (parallel, uses
    # v7x's 2nd TensorCore) and tile T with pl.Buffered pipelining; re-derive
    # block sizes for v7x's 64 MiB VMEM instead of porting v6e numbers.
    out_flat = pl.pallas_call(
        kernel,
        out_shape=jax.ShapeDtypeStruct((T * Bp, Np), jnp.float32),
        in_specs=[vmem_spec] * len(inputs),
        out_specs=vmem_spec,
    )(*inputs)

    # back to (B, T, Dout): drop padded batch rows and padded output lanes.
    out = jnp.transpose(out_flat.reshape(T, Bp, Np), (1, 0, 2))
    return out[:B, :, :Dout]


def init_params(key, num_in, num_out, hidden_dim):
    """Deterministic synthetic parameters (shapes match the PyTorch module)."""
    ks = jax.random.split(key, 10)
    H = hidden_dim

    def u(k, shape, fan_in):
        bound = 1.0 / jnp.sqrt(jnp.float32(fan_in))
        return jax.random.uniform(k, shape, jnp.float32, -bound, bound)

    # fc1: Linear(num_in, H)  -> stored transposed (in, out)
    w1 = u(ks[0], (num_in, H), num_in)
    b1 = u(ks[1], (1, H), num_in)
    # GRU (PyTorch layout): weight_ih (3H, H) [r|z|n], weight_hh (3H, H), biases (3H,)
    w_ih = u(ks[2], (3 * H, H), H)
    w_hh = u(ks[3], (3 * H, H), H)
    b_ih = u(ks[4], (3 * H,), H)
    b_hh = u(ks[5], (3 * H,), H)
    # fc2: Linear(H, H)
    w2 = u(ks[6], (H, H), H)
    b2 = u(ks[7], (1, H), H)
    # fc3: Linear(H, num_out)
    w3 = u(ks[8], (H, num_out), H)
    b3 = u(ks[9], (1, num_out), H)

    # Kernel layout: concatenated (in, 3H) gate weights, gate order [r|z|n].
    wih = jnp.concatenate(
        [w_ih[0:H].T, w_ih[H:2 * H].T, w_ih[2 * H:3 * H].T], axis=1)   # (H, 3H)
    whh = jnp.concatenate(
        [w_hh[0:H].T, w_hh[H:2 * H].T, w_hh[2 * H:3 * H].T], axis=1)   # (H, 3H)
    # Input-side bias: fold b_hh into r/z (they add linearly); keep b_ih_n here.
    bi = jnp.concatenate([
        b_ih[0:H] + b_hh[0:H],
        b_ih[H:2 * H] + b_hh[H:2 * H],
        b_ih[2 * H:3 * H],
    ]).reshape(1, 3 * H)
    # Hidden-side bias: only the n-gate part survives (multiplied by r).
    bhn = b_hh[2 * H:3 * H].reshape(1, H)

    return dict(w1=w1, b1=b1, wih=wih, bi=bi, whh=whh, bhn=bhn,
                w2=w2, b2=b2, w3=w3, b3=b3)


def reference_forward(x, p):
    """Pure-JAX reference implementing the same PyTorch semantics."""
    B, T, _ = x.shape
    H = p["w1"].shape[1]
    a = jnp.maximum(jnp.einsum("btd,dh->bth", x, p["w1"]) + p["b1"][0], 0.0)

    def step(h, at):
        gi = at @ p["wih"] + p["bi"][0]
        gh = h @ p["whh"]
        r = jax.nn.sigmoid(gi[:, 0 * H:1 * H] + gh[:, 0 * H:1 * H])
        z = jax.nn.sigmoid(gi[:, 1 * H:2 * H] + gh[:, 1 * H:2 * H])
        n = jnp.tanh(gi[:, 2 * H:3 * H] + r * (gh[:, 2 * H:3 * H] + p["bhn"][0]))
        h_new = (1.0 - z) * n + z * h
        return h_new, h_new

    h0 = jnp.zeros((B, H), jnp.float32)
    _, hs = jax.lax.scan(step, h0, jnp.transpose(a, (1, 0, 2)))  # (T, B, H)
    hs = jnp.transpose(hs, (1, 0, 2))                            # (B, T, H)
    f2 = jnp.maximum(jnp.einsum("bth,hk->btk", hs, p["w2"]) + p["b2"][0], 0.0)
    return jnp.einsum("bth,ho->bto", f2, p["w3"]) + p["b3"][0]


if __name__ == "__main__":
    batch, seq, num_in, hidden_dim, num_out = 2, 8, 16, 32, 4

    key = jax.random.PRNGKey(0)
    k_x, k_p = jax.random.split(key)
    x = jax.random.normal(k_x, (batch, seq, num_in), jnp.float32)
    params = init_params(k_p, num_in, num_out, hidden_dim)

    out = fc_with_gru_forward(x, params)
    out = jax.block_until_ready(out)

    ref = reference_forward(x, params)
    assert out.shape == (batch, seq, num_out)
    assert jnp.allclose(out, ref, atol=1e-4, rtol=1e-4), "mismatch vs reference"

    print("KERNEL_OK")
</pallas_src>

<mosaic_0001>
module attributes {stable_mosaic.version = 11 : i64} {
  func.func @_fc_gru_kernel(%arg0: memref<64x16xf32, #tpu.memory_space<vmem>>, %arg1: memref<16x32xf32, #tpu.memory_space<vmem>>, %arg2: memref<1x32xf32, #tpu.memory_space<vmem>>, %arg3: memref<32x96xf32, #tpu.memory_space<vmem>>, %arg4: memref<1x96xf32, #tpu.memory_space<vmem>>, %arg5: memref<32x96xf32, #tpu.memory_space<vmem>>, %arg6: memref<1x32xf32, #tpu.memory_space<vmem>>, %arg7: memref<32x32xf32, #tpu.memory_space<vmem>>, %arg8: memref<1x32xf32, #tpu.memory_space<vmem>>, %arg9: memref<32x128xf32, #tpu.memory_space<vmem>>, %arg10: memref<1x128xf32, #tpu.memory_space<vmem>>, %arg11: memref<64x128xf32, #tpu.memory_space<vmem>>) attributes {dimension_semantics = [], scalar_prefetch = 0 : i64, scratch_operands = 0 : i64, tpu.core_type = #tpu.core_type<tc>} {
    %c0 = arith.constant 0 : index
    %c0_0 = arith.constant 0 : index
    %0 = vector.load %arg0[%c0, %c0_0] : memref<64x16xf32, #tpu.memory_space<vmem>>, vector<64x16xf32>
    %c0_1 = arith.constant 0 : index
    %c0_2 = arith.constant 0 : index
    %1 = vector.load %arg1[%c0_1, %c0_2] : memref<16x32xf32, #tpu.memory_space<vmem>>, vector<16x32xf32>
    %cst = arith.constant dense<0.000000e+00> : vector<64x32xf32>
    %2 = tpu.matmul %0, %1, %cst {dimension_numbers = #tpu.dot_dimension_numbers<[1], [0], [0], [1], [0, 0, 1, 1], [], []>} : vector<64x16xf32>, vector<16x32xf32>, vector<64x32xf32> -> vector<64x32xf32>
    %c0_3 = arith.constant 0 : index
    %c0_4 = arith.constant 0 : index
    %3 = vector.load %arg2[%c0_3, %c0_4] : memref<1x32xf32, #tpu.memory_space<vmem>>, vector<1x32xf32>
    %4 = vector.broadcast %3 : vector<1x32xf32> to vector<64x32xf32>
    %5 = arith.addf %2, %4 : vector<64x32xf32>
    %cst_5 = arith.constant 0.000000e+00 : f32
    %6 = vector.broadcast %cst_5 : f32 to vector<64x32xf32>
    %7 = arith.maximumf %5, %6 : vector<64x32xf32>
    %c0_6 = arith.constant 0 : index
    %c0_7 = arith.constant 0 : index
    %8 = vector.load %arg3[%c0_6, %c0_7] : memref<32x96xf32, #tpu.memory_space<vmem>>, vector<32x96xf32>
    %cst_8 = arith.constant dense<0.000000e+00> : vector<64x96xf32>
    %9 = tpu.matmul %7, %8, %cst_8 {dimension_numbers = #tpu.dot_dimension_numbers<[1], [0], [0], [1], [0, 0, 1, 1], [], []>} : vector<64x32xf32>, vector<32x96xf32>, vector<64x96xf32> -> vector<64x96xf32>
    %c0_9 = arith.constant 0 : index
    %c0_10 = arith.constant 0 : index
    %10 = vector.load %arg4[%c0_9, %c0_10] : memref<1x96xf32, #tpu.memory_space<vmem>>, vector<1x96xf32>
    %11 = vector.broadcast %10 : vector<1x96xf32> to vector<64x96xf32>
    %12 = arith.addf %9, %11 : vector<64x96xf32>
    %13 = vector.extract_strided_slice %12 {offsets = [0, 0], sizes = [64, 32], strides = [1, 1]} : vector<64x96xf32> to vector<64x32xf32>
    %14 = vector.extract_strided_slice %12 {offsets = [0, 32], sizes = [64, 32], strides = [1, 1]} : vector<64x96xf32> to vector<64x32xf32>
    %15 = vector.extract_strided_slice %12 {offsets = [0, 64], sizes = [64, 32], strides = [1, 1]} : vector<64x96xf32> to vector<64x32xf32>
    %c0_11 = arith.constant 0 : index
    %c0_12 = arith.constant 0 : index
    %16 = vector.load %arg5[%c0_11, %c0_12] : memref<32x96xf32, #tpu.memory_space<vmem>>, vector<32x96xf32>
    %c0_13 = arith.constant 0 : index
    %c0_14 = arith.constant 0 : index
    %17 = vector.load %arg6[%c0_13, %c0_14] : memref<1x32xf32, #tpu.memory_space<vmem>>, vector<1x32xf32>
    %18 = vector.shape_cast %17 : vector<1x32xf32> to vector<1x32xf32>
    %19 = vector.broadcast %18 : vector<1x32xf32> to vector<8x32xf32>
    %cst_15 = arith.constant 0.000000e+00 : f32
    %20 = vector.broadcast %cst_15 : f32 to vector<8x32xf32>
    %cst_16 = arith.constant dense<0.000000e+00> : vector<8x96xf32>
    %21 = tpu.matmul %20, %16, %cst_16 {dimension_numbers = #tpu.dot_dimension_numbers<[1], [0], [0], [1], [0, 0, 1, 1], [], []>} : vector<8x32xf32>, vector<32x96xf32>, vector<8x96xf32> -> vector<8x96xf32>
    %22 = vector.extract_strided_slice %13 {offsets = [0, 0], sizes = [8, 32], strides = [1, 1]} : vector<64x32xf32> to vector<8x32xf32>
    %23 = vector.extract_strided_slice %21 {offsets = [0, 0], sizes = [8, 32], strides = [1, 1]} : vector<8x96xf32> to vector<8x32xf32>
    %24 = arith.addf %22, %23 : vector<8x32xf32>
    %25 = arith.negf %24 : vector<8x32xf32>
    %26 = math.exp %25 : vector<8x32xf32>
    %cst_17 = arith.constant 1.000000e+00 : f32
    %27 = vector.broadcast %cst_17 : f32 to vector<8x32xf32>
    %28 = arith.addf %27, %26 : vector<8x32xf32>
    %29 = arith.divf %27, %28 : vector<8x32xf32>
    %30 = vector.extract_strided_slice %14 {offsets = [0, 0], sizes = [8, 32], strides = [1, 1]} : vector<64x32xf32> to vector<8x32xf32>
    %31 = vector.extract_strided_slice %21 {offsets = [0, 32], sizes = [8, 32], strides = [1, 1]} : vector<8x96xf32> to vector<8x32xf32>
    %32 = arith.addf %30, %31 : vector<8x32xf32>
    %33 = arith.negf %32 : vector<8x32xf32>
    %34 = math.exp %33 : vector<8x32xf32>
    %cst_18 = arith.constant 1.000000e+00 : f32
    %35 = vector.broadcast %cst_18 : f32 to vector<8x32xf32>
    %36 = arith.addf %35, %34 : vector<8x32xf32>
    %37 = arith.divf %35, %36 : vector<8x32xf32>
    %38 = vector.extract_strided_slice %15 {offsets = [0, 0], sizes = [8, 32], strides = [1, 1]} : vector<64x32xf32> to vector<8x32xf32>
    %39 = vector.extract_strided_slice %21 {offsets = [0, 64], sizes = [8, 32], strides = [1, 1]} : vector<8x96xf32> to vector<8x32xf32>
    %40 = arith.addf %39, %19 : vector<8x32xf32>
    %41 = arith.mulf %29, %40 : vector<8x32xf32>
    %42 = arith.addf %38, %41 : vector<8x32xf32>
    %43 = math.tanh %42 : vector<8x32xf32>
    %44 = arith.subf %20, %43 : vector<8x32xf32>
    %45 = arith.mulf %37, %44 : vector<8x32xf32>
    %46 = arith.addf %43, %45 : vector<8x32xf32>
    %cst_19 = arith.constant dense<0.000000e+00> : vector<8x96xf32>
    %47 = tpu.matmul %46, %16, %cst_19 {dimension_numbers = #tpu.dot_dimension_numbers<[1], [0], [0], [1], [0, 0, 1, 1], [], []>} : vector<8x32xf32>, vector<32x96xf32>, vector<8x96xf32> -> vector<8x96xf32>
    %48 = vector.extract_strided_slice %13 {offsets = [8, 0], sizes = [8, 32], strides = [1, 1]} : vector<64x32xf32> to vector<8x32xf32>
    %49 = vector.extract_strided_slice %47 {offsets = [0, 0], sizes = [8, 32], strides = [1, 1]} : vector<8x96xf32> to vector<8x32xf32>
    %50 = arith.addf %48, %49 : vector<8x32xf32>
    %51 = arith.negf %50 : vector<8x32xf32>
    %52 = math.exp %51 : vector<8x32xf32>
    %cst_20 = arith.constant 1.000000e+00 : f32
    %53 = vector.broadcast %cst_20 : f32 to vector<8x32xf32>
    %54 = arith.addf %53, %52 : vector<8x32xf32>
    %55 = arith.divf %53, %54 : vector<8x32xf32>
    %56 = vector.extract_strided_slice %14 {offsets = [8, 0], sizes = [8, 32], strides = [1, 1]} : vector<64x32xf32> to vector<8x32xf32>
    %57 = vector.extract_strided_slice %47 {offsets = [0, 32], sizes = [8, 32], strides = [1, 1]} : vector<8x96xf32> to vector<8x32xf32>
    %58 = arith.addf %56, %57 : vector<8x32xf32>
    %59 = arith.negf %58 : vector<8x32xf32>
    %60 = math.exp %59 : vector<8x32xf32>
    %cst_21 = arith.constant 1.000000e+00 : f32
    %61 = vector.broadcast %cst_21 : f32 to vector<8x32xf32>
    %62 = arith.addf %61, %60 : vector<8x32xf32>
    %63 = arith.divf %61, %62 : vector<8x32xf32>
    %64 = vector.extract_strided_slice %15 {offsets = [8, 0], sizes = [8, 32], strides = [1, 1]} : vector<64x32xf32> to vector<8x32xf32>
    %65 = vector.extract_strided_slice %47 {offsets = [0, 64], sizes = [8, 32], strides = [1, 1]} : vector<8x96xf32> to vector<8x32xf32>
    %66 = arith.addf %65, %19 : vector<8x32xf32>
    %67 = arith.mulf %55, %66 : vector<8x32xf32>
    %68 = arith.addf %64, %67 : vector<8x32xf32>
    %69 = math.tanh %68 : vector<8x32xf32>
    %70 = arith.subf %46, %69 : vector<8x32xf32>
    %71 = arith.mulf %63, %70 : vector<8x32xf32>
    %72 = arith.addf %69, %71 : vector<8x32xf32>
    %cst_22 = arith.constant dense<0.000000e+00> : vector<8x96xf32>
    %73 = tpu.matmul %72, %16, %cst_22 {dimension_numbers = #tpu.dot_dimension_numbers<[1], [0], [0], [1], [0, 0, 1, 1], [], []>} : vector<8x32xf32>, vector<32x96xf32>, vector<8x96xf32> -> vector<8x96xf32>
    %74 = vector.extract_strided_slice %13 {offsets = [16, 0], sizes = [8, 32], strides = [1, 1]} : vector<64x32xf32> to vector<8x32xf32>
    %75 = vector.extract_strided_slice %73 {offsets = [0, 0], sizes = [8, 32], strides = [1, 1]} : vector<8x96xf32> to vector<8x32xf32>
    %76 = arith.addf %74, %75 : vector<8x32xf32>
    %77 = arith.negf %76 : vector<8x32xf32>
    %78 = math.exp %77 : vector<8x32xf32>
    %cst_23 = arith.constant 1.000000e+00 : f32
    %79 = vector.broadcast %cst_23 : f32 to vector<8x32xf32>
    %80 = arith.addf %79, %78 : vector<8x32xf32>
    %81 = arith.divf %79, %80 : vector<8x32xf32>
    %82 = vector.extract_strided_slice %14 {offsets = [16, 0], sizes = [8, 32], strides = [1, 1]} : vector<64x32xf32> to vector<8x32xf32>
    %83 = vector.extract_strided_slice %73 {offsets = [0, 32], sizes = [8, 32], strides = [1, 1]} : vector<8x96xf32> to vector<8x32xf32>
    %84 = arith.addf %82, %83 : vector<8x32xf32>
    %85 = arith.negf %84 : vector<8x32xf32>
    %86 = math.exp %85 : vector<8x32xf32>
    %cst_24 = arith.constant 1.000000e+00 : f32
    %87 = vector.broadcast %cst_24 : f32 to vector<8x32xf32>
    %88 = arith.addf %87, %86 : vector<8x32xf32>
    %89 = arith.divf %87, %88 : vector<8x32xf32>
    %90 = vector.extract_strided_slice %15 {offsets = [16, 0], sizes = [8, 32], strides = [1, 1]} : vector<64x32xf32> to vector<8x32xf32>
    %91 = vector.extract_strided_slice %73 {offsets = [0, 64], sizes = [8, 32], strides = [1, 1]} : vector<8x96xf32> to vector<8x32xf32>
    %92 = arith.addf %91, %19 : vector<8x32xf32>
    %93 = arith.mulf %81, %92 : vector<8x32xf32>
    %94 = arith.addf %90, %93 : vector<8x32xf32>
    %95 = math.tanh %94 : vector<8x32xf32>
    %96 = arith.subf %72, %95 : vector<8x32xf32>
    %97 = arith.mulf %89, %96 : vector<8x32xf32>
    %98 = arith.addf %95, %97 : vector<8x32xf32>
    %cst_25 = arith.constant dense<0.000000e+00> : vector<8x96xf32>
    %99 = tpu.matmul %98, %16, %cst_25 {dimension_numbers = #tpu.dot_dimension_numbers<[1], [0], [0], [1], [0, 0, 1, 1], [], []>} : vector<8x32xf32>, vector<32x96xf32>, vector<8x96xf32> -> vector<8x96xf32>
    %100 = vector.extract_strided_slice %13 {offsets = [24, 0], sizes = [8, 32], strides = [1, 1]} : vector<64x32xf32> to vector<8x32xf32>
    %101 = vector.extract_strided_slice %99 {offsets = [0, 0], sizes = [8, 32], strides = [1, 1]} : vector<8x96xf32> to vector<8x32xf32>
    %102 = arith.addf %100, %101 : vector<8x32xf32>
    %103 = arith.negf %102 : vector<8x32xf32>
    %104 = math.exp %103 : vector<8x32xf32>
    %cst_26 = arith.constant 1.000000e+00 : f32
    %105 = vector.broadcast %cst_26 : f32 to vector<8x32xf32>
    %106 = arith.addf %105, %104 : vector<8x32xf32>
    %107 = arith.divf %105, %106 : vector<8x32xf32>
    %108 = vector.extract_strided_slice %14 {offsets = [24, 0], sizes = [8, 32], strides = [1, 1]} : vector<64x32xf32> to vector<8x32xf32>
    %109 = vector.extract_strided_slice %99 {offsets = [0, 32], sizes = [8, 32], strides = [1, 1]} : vector<8x96xf32> to vector<8x32xf32>
    %110 = arith.addf %108, %109 : vector<8x32xf32>
    %111 = arith.negf %110 : vector<8x32xf32>
    %112 = math.exp %111 : vector<8x32xf32>
    %cst_27 = arith.constant 1.000000e+00 : f32
    %113 = vector.broadcast %cst_27 : f32 to vector<8x32xf32>
    %114 = arith.addf %113, %112 : vector<8x32xf32>
    %115 = arith.divf %113, %114 : vector<8x32xf32>
    %116 = vector.extract_strided_slice %15 {offsets = [24, 0], sizes = [8, 32], strides = [1, 1]} : vector<64x32xf32> to vector<8x32xf32>
    %117 = vector.extract_strided_slice %99 {offsets = [0, 64], sizes = [8, 32], strides = [1, 1]} : vector<8x96xf32> to vector<8x32xf32>
    %118 = arith.addf %117, %19 : vector<8x32xf32>
    %119 = arith.mulf %107, %118 : vector<8x32xf32>
    %120 = arith.addf %116, %119 : vector<8x32xf32>
    %121 = math.tanh %120 : vector<8x32xf32>
    %122 = arith.subf %98, %121 : vector<8x32xf32>
    %123 = arith.mulf %115, %122 : vector<8x32xf32>
    %124 = arith.addf %121, %123 : vector<8x32xf32>
    %cst_28 = arith.constant dense<0.000000e+00> : vector<8x96xf32>
    %125 = tpu.matmul %124, %16, %cst_28 {dimension_numbers = #tpu.dot_dimension_numbers<[1], [0], [0], [1], [0, 0, 1, 1], [], []>} : vector<8x32xf32>, vector<32x96xf32>, vector<8x96xf32> -> vector<8x96xf32>
    %126 = vector.extract_strided_slice %13 {offsets = [32, 0], sizes = [8, 32], strides = [1, 1]} : vector<64x32xf32> to vector<8x32xf32>
    %127 = vector.extract_strided_slice %125 {offsets = [0, 0], sizes = [8, 32], strides = [1, 1]} : vector<8x96xf32> to vector<8x32xf32>
    %128 = arith.addf %126, %127 : vector<8x32xf32>
    %129 = arith.negf %128 : vector<8x32xf32>
    %130 = math.exp %129 : vector<8x32xf32>
    %cst_29 = arith.constant 1.000000e+00 : f32
    %131 = vector.broadcast %cst_29 : f32 to vector<8x32xf32>
    %132 = arith.addf %131, %130 : vector<8x32xf32>
    %133 = arith.divf %131, %132 : vector<8x32xf32>
    %134 = vector.extract_strided_slice %14 {offsets = [32, 0], sizes = [8, 32], strides = [1, 1]} : vector<64x32xf32> to vector<8x32xf32>
    %135 = vector.extract_strided_slice %125 {offsets = [0, 32], sizes = [8, 32], strides = [1, 1]} : vector<8x96xf32> to vector<8x32xf32>
    %136 = arith.addf %134, %135 : vector<8x32xf32>
    %137 = arith.negf %136 : vector<8x32xf32>
    %138 = math.exp %137 : vector<8x32xf32>
    %cst_30 = arith.constant 1.000000e+00 : f32
    %139 = vector.broadcast %cst_30 : f32 to vector<8x32xf32>
    %140 = arith.addf %139, %138 : vector<8x32xf32>
    %141 = arith.divf %139, %140 : vector<8x32xf32>
    %142 = vector.extract_strided_slice %15 {offsets = [32, 0], sizes = [8, 32], strides = [1, 1]} : vector<64x32xf32> to vector<8x32xf32>
    %143 = vector.extract_strided_slice %125 {offsets = [0, 64], sizes = [8, 32], strides = [1, 1]} : vector<8x96xf32> to vector<8x32xf32>
    %144 = arith.addf %143, %19 : vector<8x32xf32>
    %145 = arith.mulf %133, %144 : vector<8x32xf32>
    %146 = arith.addf %142, %145 : vector<8x32xf32>
    %147 = math.tanh %146 : vector<8x32xf32>
    %148 = arith.subf %124, %147 : vector<8x32xf32>
    %149 = arith.mulf %141, %148 : vector<8x32xf32>
    %150 = arith.addf %147, %149 : vector<8x32xf32>
    %cst_31 = arith.constant dense<0.000000e+00> : vector<8x96xf32>
    %151 = tpu.matmul %150, %16, %cst_31 {dimension_numbers = #tpu.dot_dimension_numbers<[1], [0], [0], [1], [0, 0, 1, 1], [], []>} : vector<8x32xf32>, vector<32x96xf32>, vector<8x96xf32> -> vector<8x96xf32>
    %152 = vector.extract_strided_slice %13 {offsets = [40, 0], sizes = [8, 32], strides = [1, 1]} : vector<64x32xf32> to vector<8x32xf32>
    %153 = vector.extract_strided_slice %151 {offsets = [0, 0], sizes = [8, 32], strides = [1, 1]} : vector<8x96xf32> to vector<8x32xf32>
    %154 = arith.addf %152, %153 : vector<8x32xf32>
    %155 = arith.negf %154 : vector<8x32xf32>
    %156 = math.exp %155 : vector<8x32xf32>
    %cst_32 = arith.constant 1.000000e+00 : f32
    %157 = vector.broadcast %cst_32 : f32 to vector<8x32xf32>
    %158 = arith.addf %157, %156 : vector<8x32xf32>
    %159 = arith.divf %157, %158 : vector<8x32xf32>
    %160 = vector.extract_strided_slice %14 {offsets = [40, 0], sizes = [8, 32], strides = [1, 1]} : vector<64x32xf32> to vector<8x32xf32>
    %161 = vector.extract_strided_slice %151 {offsets = [0, 32], sizes = [8, 32], strides = [1, 1]} : vector<8x96xf32> to vector<8x32xf32>
    %162 = arith.addf %160, %161 : vector<8x32xf32>
    %163 = arith.negf %162 : vector<8x32xf32>
    %164 = math.exp %163 : vector<8x32xf32>
    %cst_33 = arith.constant 1.000000e+00 : f32
    %165 = vector.broadcast %cst_33 : f32 to vector<8x32xf32>
    %166 = arith.addf %165, %164 : vector<8x32xf32>
    %167 = arith.divf %165, %166 : vector<8x32xf32>
    %168 = vector.extract_strided_slice %15 {offsets = [40, 0], sizes = [8, 32], strides = [1, 1]} : vector<64x32xf32> to vector<8x32xf32>
    %169 = vector.extract_strided_slice %151 {offsets = [0, 64], sizes = [8, 32], strides = [1, 1]} : vector<8x96xf32> to vector<8x32xf32>
    %170 = arith.addf %169, %19 : vector<8x32xf32>
    %171 = arith.mulf %159, %170 : vector<8x32xf32>
    %172 = arith.addf %168, %171 : vector<8x32xf32>
    %173 = math.tanh %172 : vector<8x32xf32>
    %174 = arith.subf %150, %173 : vector<8x32xf32>
    %175 = arith.mulf %167, %174 : vector<8x32xf32>
    %176 = arith.addf %173, %175 : vector<8x32xf32>
    %cst_34 = arith.constant dense<0.000000e+00> : vector<8x96xf32>
    %177 = tpu.matmul %176, %16, %cst_34 {dimension_numbers = #tpu.dot_dimension_numbers<[1], [0], [0], [1], [0, 0, 1, 1], [], []>} : vector<8x32xf32>, vector<32x96xf32>, vector<8x96xf32> -> vector<8x96xf32>
    %178 = vector.extract_strided_slice %13 {offsets = [48, 0], sizes = [8, 32], strides = [1, 1]} : vector<64x32xf32> to vector<8x32xf32>
    %179 = vector.extract_strided_slice %177 {offsets = [0, 0], sizes = [8, 32], strides = [1, 1]} : vector<8x96xf32> to vector<8x32xf32>
    %180 = arith.addf %178, %179 : vector<8x32xf32>
    %181 = arith.negf %180 : vector<8x32xf32>
    %182 = math.exp %181 : vector<8x32xf32>
    %cst_35 = arith.constant 1.000000e+00 : f32
    %183 = vector.broadcast %cst_35 : f32 to vector<8x32xf32>
    %184 = arith.addf %183, %182 : vector<8x32xf32>
    %185 = arith.divf %183, %184 : vector<8x32xf32>
    %186 = vector.extract_strided_slice %14 {offsets = [48, 0], sizes = [8, 32], strides = [1, 1]} : vector<64x32xf32> to vector<8x32xf32>
    %187 = vector.extract_strided_slice %177 {offsets = [0, 32], sizes = [8, 32], strides = [1, 1]} : vector<8x96xf32> to vector<8x32xf32>
    %188 = arith.addf %186, %187 : vector<8x32xf32>
    %189 = arith.negf %188 : vector<8x32xf32>
    %190 = math.exp %189 : vector<8x32xf32>
    %cst_36 = arith.constant 1.000000e+00 : f32
    %191 = vector.broadcast %cst_36 : f32 to vector<8x32xf32>
    %192 = arith.addf %191, %190 : vector<8x32xf32>
    %193 = arith.divf %191, %192 : vector<8x32xf32>
    %194 = vector.extract_strided_slice %15 {offsets = [48, 0], sizes = [8, 32], strides = [1, 1]} : vector<64x32xf32> to vector<8x32xf32>
    %195 = vector.extract_strided_slice %177 {offsets = [0, 64], sizes = [8, 32], strides = [1, 1]} : vector<8x96xf32> to vector<8x32xf32>
    %196 = arith.addf %195, %19 : vector<8x32xf32>
    %197 = arith.mulf %185, %196 : vector<8x32xf32>
    %198 = arith.addf %194, %197 : vector<8x32xf32>
    %199 = math.tanh %198 : vector<8x32xf32>
    %200 = arith.subf %176, %199 : vector<8x32xf32>
    %201 = arith.mulf %193, %200 : vector<8x32xf32>
    %202 = arith.addf %199, %201 : vector<8x32xf32>
    %cst_37 = arith.constant dense<0.000000e+00> : vector<8x96xf32>
    %203 = tpu.matmul %202, %16, %cst_37 {dimension_numbers = #tpu.dot_dimension_numbers<[1], [0], [0], [1], [0, 0, 1, 1], [], []>} : vector<8x32xf32>, vector<32x96xf32>, vector<8x96xf32> -> vector<8x96xf32>
    %204 = vector.extract_strided_slice %13 {offsets = [56, 0], sizes = [8, 32], strides = [1, 1]} : vector<64x32xf32> to vector<8x32xf32>
    %205 = vector.extract_strided_slice %203 {offsets = [0, 0], sizes = [8, 32], strides = [1, 1]} : vector<8x96xf32> to vector<8x32xf32>
    %206 = arith.addf %204, %205 : vector<8x32xf32>
    %207 = arith.negf %206 : vector<8x32xf32>
    %208 = math.exp %207 : vector<8x32xf32>
    %cst_38 = arith.constant 1.000000e+00 : f32
    %209 = vector.broadcast %cst_38 : f32 to vector<8x32xf32>
    %210 = arith.addf %209, %208 : vector<8x32xf32>
    %211 = arith.divf %209, %210 : vector<8x32xf32>
    %212 = vector.extract_strided_slice %14 {offsets = [56, 0], sizes = [8, 32], strides = [1, 1]} : vector<64x32xf32> to vector<8x32xf32>
    %213 = vector.extract_strided_slice %203 {offsets = [0, 32], sizes = [8, 32], strides = [1, 1]} : vector<8x96xf32> to vector<8x32xf32>
    %214 = arith.addf %212, %213 : vector<8x32xf32>
    %215 = arith.negf %214 : vector<8x32xf32>
    %216 = math.exp %215 : vector<8x32xf32>
    %cst_39 = arith.constant 1.000000e+00 : f32
    %217 = vector.broadcast %cst_39 : f32 to vector<8x32xf32>
    %218 = arith.addf %217, %216 : vector<8x32xf32>
    %219 = arith.divf %217, %218 : vector<8x32xf32>
    %220 = vector.extract_strided_slice %15 {offsets = [56, 0], sizes = [8, 32], strides = [1, 1]} : vector<64x32xf32> to vector<8x32xf32>
    %221 = vector.extract_strided_slice %203 {offsets = [0, 64], sizes = [8, 32], strides = [1, 1]} : vector<8x96xf32> to vector<8x32xf32>
    %222 = arith.addf %221, %19 : vector<8x32xf32>
    %223 = arith.mulf %211, %222 : vector<8x32xf32>
    %224 = arith.addf %220, %223 : vector<8x32xf32>
    %225 = math.tanh %224 : vector<8x32xf32>
    %226 = arith.subf %202, %225 : vector<8x32xf32>
    %227 = arith.mulf %219, %226 : vector<8x32xf32>
    %228 = arith.addf %225, %227 : vector<8x32xf32>
    %229 = tpu.concatenate %46, %72, %98, %124, %150, %176, %202, %228 in 0 : vector<8x32xf32>, vector<8x32xf32>, vector<8x32xf32>, vector<8x32xf32>, vector<8x32xf32>, vector<8x32xf32>, vector<8x32xf32>, vector<8x32xf32> -> vector<64x32xf32>
    %c0_40 = arith.constant 0 : index
    %c0_41 = arith.constant 0 : index
    %230 = vector.load %arg7[%c0_40, %c0_41] : memref<32x32xf32, #tpu.memory_space<vmem>>, vector<32x32xf32>
    %cst_42 = arith.constant dense<0.000000e+00> : vector<64x32xf32>
    %231 = tpu.matmul %229, %230, %cst_42 {dimension_numbers = #tpu.dot_dimension_numbers<[1], [0], [0], [1], [0, 0, 1, 1], [], []>} : vector<64x32xf32>, vector<32x32xf32>, vector<64x32xf32> -> vector<64x32xf32>
    %c0_43 = arith.constant 0 : index
    %c0_44 = arith.constant 0 : index
    %232 = vector.load %arg8[%c0_43, %c0_44] : memref<1x32xf32, #tpu.memory_space<vmem>>, vector<1x32xf32>
    %233 = vector.broadcast %232 : vector<1x32xf32> to vector<64x32xf32>
    %234 = arith.addf %231, %233 : vector<64x32xf32>
    %cst_45 = arith.constant 0.000000e+00 : f32
    %235 = vector.broadcast %cst_45 : f32 to vector<64x32xf32>
    %236 = arith.maximumf %234, %235 : vector<64x32xf32>
    %c0_46 = arith.constant 0 : index
    %c0_47 = arith.constant 0 : index
    %237 = vector.load %arg9[%c0_46, %c0_47] : memref<32x128xf32, #tpu.memory_space<vmem>>, vector<32x128xf32>
    %cst_48 = arith.constant dense<0.000000e+00> : vector<64x128xf32>
    %238 = tpu.matmul %236, %237, %cst_48 {dimension_numbers = #tpu.dot_dimension_numbers<[1], [0], [0], [1], [0, 0, 1, 1], [], []>} : vector<64x32xf32>, vector<32x128xf32>, vector<64x128xf32> -> vector<64x128xf32>
    %c0_49 = arith.constant 0 : index
    %c0_50 = arith.constant 0 : index
    %239 = vector.load %arg10[%c0_49, %c0_50] : memref<1x128xf32, #tpu.memory_space<vmem>>, vector<1x128xf32>
    %240 = vector.broadcast %239 : vector<1x128xf32> to vector<64x128xf32>
    %241 = arith.addf %238, %240 : vector<64x128xf32>
    %c0_51 = arith.constant 0 : index
    %c0_52 = arith.constant 0 : index
    %242 = vector.load %arg11[%c0_51, %c0_52] : memref<64x128xf32, #tpu.memory_space<vmem>>, vector<64x128xf32>
    tpu.vector_store %arg11[%c0_51, %c0_52], %241 {strides = array<i32>} : memref<64x128xf32, #tpu.memory_space<vmem>>, vector<64x128xf32>,
    return
  }
}

</mosaic_0001>

<llo_original>
// kernel: tpu_custom_call.1
$region0: #{tpu_custom_call.1}
  #allocation0 [shape = 'u32[]', space=smem, size = 0x4, offset = 0x4, fixed_abs, tag = 'smem constant byte address 0x4 - core index']
  #allocation1 [shape = 'u32[144,128]{1,0:T(1,128)}', space=vmem, size = 0x12000, scoped, tag = 'internal scratch']
  %s0 = inlined_call_operand.vmem [shape: f32[64,16], index: 0, kind: input, shape index: {}]
  %s1 = inlined_call_operand.hbm [shape: f32[16,32], index: 1, kind: input, shape index: {}]
  %s2 = inlined_call_operand.hbm [shape: f32[1,32], index: 2, kind: input, shape index: {}]
  %s3 = inlined_call_operand.vmem [shape: f32[32,96], index: 3, kind: input, shape index: {}]
  %s4 = inlined_call_operand.hbm [shape: f32[1,96], index: 4, kind: input, shape index: {}]
  %s5 = inlined_call_operand.vmem [shape: f32[32,96], index: 5, kind: input, shape index: {}]
  %s6 = inlined_call_operand.hbm [shape: f32[1,32], index: 6, kind: input, shape index: {}]
  %s7 = inlined_call_operand.hbm [shape: f32[32,32], index: 7, kind: input, shape index: {}]
  %s8 = inlined_call_operand.hbm [shape: f32[1,32], index: 8, kind: input, shape index: {}]
  %s9 = inlined_call_operand.vmem [shape: f32[32,128], index: 9, kind: input, shape index: {}]
  %s10 = inlined_call_operand.vmem [shape: f32[1,128], index: 10, kind: input, shape index: {}]
  %s11 = inlined_call_operand.hbm [shape: f32[64,128], index: 11, kind: output, shape index: {}]
  %s12 = sld [smem:[#allocation0]]
  $region78: #{tpu_custom_call.1} parent=0
    _
  %s14 = ssub.s32 1, %s12
  %s15 = scalar_select 0, %s14, %s12
  $region1: #{tpu_custom_call.1} parent=0
    #allocation2 [shape = 'u8[8192]{0}', space=vmem, size = 0x2000, scoped, tag = 'input window, operand 1, single buffered']
    #allocation3 [shape = 's32[1]{0}', space=sflag, size = 0x4, scoped, tag = 'scoped memory for tpu_custom_call.1']
    #allocation4 [shape = 's32[1]{0}', space=sflag, size = 0x4, scoped, tag = 'scoped memory for tpu_custom_call.1']
    #allocation5 [shape = 'u8[512]{0}', space=vmem, size = 0x400, scoped, tag = 'input window, operand 2, single buffered']
    #allocation6 [shape = 's32[1]{0}', space=sflag, size = 0x4, scoped, tag = 'scoped memory for tpu_custom_call.1']
    #allocation7 [shape = 'u8[512]{0}', space=vmem, size = 0x400, scoped, tag = 'input window, operand 4, single buffered']
    #allocation8 [shape = 'u8[512]{0}', space=vmem, size = 0x400, scoped, tag = 'input window, operand 6, single buffered']
    #allocation9 [shape = 's32[1]{0}', space=sflag, size = 0x4, scoped, tag = 'scoped memory for tpu_custom_call.1']
    #allocation10 [shape = 'u8[16384]{0}', space=vmem, size = 0x4000, scoped, tag = 'input window, operand 7, single buffered']
    #allocation11 [shape = 'u8[512]{0}', space=vmem, size = 0x400, scoped, tag = 'input window, operand 8, single buffered']
    #allocation12 [shape = 's32[1]{0}', space=sflag, size = 0x4, scoped, tag = 'scoped memory for tpu_custom_call.1']
    #allocation13 [shape = 'u8[32768]{0}', space=vmem, size = 0x8000, scoped, tag = 'output window, operand 0, single buffered']
    %16 = vsyncpa [#allocation3], 0
    %17 = vsyncpa [#allocation6], 0
    %18 = vsyncpa [#allocation9], 0
    %19 = vsyncpa [#allocation12], 0
    %20 = vsyncpa [#allocation4], 0
    // Predicated region
    $region2: #{tpu_custom_call.1} parent=1 // pred_check
      _
    $region3: #{tpu_custom_call.1} parent=1 // pred_check_branch
      %22 = sbr.rel (0) target = $region5
    $region4: #{tpu_custom_call.1} parent=1 // pred_region
      _
    $region5: #{tpu_custom_call.1} parent=1 // pred_fallthru
      _
    // Predicated region
    $region6: #{tpu_custom_call.1} parent=1 // pred_check
      _
    $region7: #{tpu_custom_call.1} parent=1 // pred_check_branch
      %24 = sbr.rel (0) target = $region9
    $region8: #{tpu_custom_call.1} parent=1 // pred_region
      %s26 = ssub.s32 256, 256
      %27 = vsyncadd [#allocation3], %s26
      %s28 = sshll.u32 [#allocation2], 4
      %s29 = int_to_ptr.vmem [resolvable:$true] %s28
      %34 = dma.hbm_to_vmem [thread:$0]  %s1, 256, %s29, [#allocation3], 128, 128, 8
    $region9: #{tpu_custom_call.1} parent=1 // pred_fallthru
      _
    // Predicated region
    $region10: #{tpu_custom_call.1} parent=1 // pred_check
      _
    $region11: #{tpu_custom_call.1} parent=1 // pred_check_branch
      %36 = sbr.rel (0) target = $region13
    $region12: #{tpu_custom_call.1} parent=1 // pred_region
      %s38 = ssub.s32 16, 16
      %39 = vsyncadd [#allocation6], %s38
      %s41 = sshll.u32 [#allocation5], 4
      %s42 = int_to_ptr.vmem [resolvable:$true] %s41
      %44 = dma.hbm_to_vmem [thread:$0]  %s2, 16, %s42, [#allocation6]
    $region13: #{tpu_custom_call.1} parent=1 // pred_fallthru
      _
    // Predicated region
    $region14: #{tpu_custom_call.1} parent=1 // pred_check
      _
    $region15: #{tpu_custom_call.1} parent=1 // pred_check_branch
      %46 = sbr.rel (0) target = $region17
    $region16: #{tpu_custom_call.1} parent=1 // pred_region
      _
    $region17: #{tpu_custom_call.1} parent=1 // pred_fallthru
      _
    // Predicated region
    $region18: #{tpu_custom_call.1} parent=1 // pred_check
      _
    $region19: #{tpu_custom_call.1} parent=1 // pred_check_branch
      %48 = sbr.rel (0) target = $region21
    $region20: #{tpu_custom_call.1} parent=1 // pred_region
      %s50 = ssub.s32 16, 16
      %51 = vsyncadd [#allocation6], %s50
      %s53 = sshll.u32 [#allocation7], 4
      %s54 = int_to_ptr.vmem [resolvable:$true] %s53
      %56 = dma.hbm_to_vmem [thread:$0]  %s4, 16, %s54, [#allocation6]
    $region21: #{tpu_custom_call.1} parent=1 // pred_fallthru
      _
    // Predicated region
    $region22: #{tpu_custom_call.1} parent=1 // pred_check
      _
    $region23: #{tpu_custom_call.1} parent=1 // pred_check_branch
      %58 = sbr.rel (0) target = $region25
    $region24: #{tpu_custom_call.1} parent=1 // pred_region
      _
    $region25: #{tpu_custom_call.1} parent=1 // pred_fallthru
      _
    // Predicated region
    $region26: #{tpu_custom_call.1} parent=1 // pred_check
      _
    $region27: #{tpu_custom_call.1} parent=1 // pred_check_branch
      %60 = sbr.rel (0) target = $region29
    $region28: #{tpu_custom_call.1} parent=1 // pred_region
      %s62 = ssub.s32 16, 16
      %63 = vsyncadd [#allocation9], %s62
      %s65 = sshll.u32 [#allocation8], 4
      %s66 = int_to_ptr.vmem [resolvable:$true] %s65
      %68 = dma.hbm_to_vmem [thread:$0]  %s6, 16, %s66, [#allocation9]
    $region29: #{tpu_custom_call.1} parent=1 // pred_fallthru
      _
    // Predicated region
    $region30: #{tpu_custom_call.1} parent=1 // pred_check
      _
    $region31: #{tpu_custom_call.1} parent=1 // pred_check_branch
      %70 = sbr.rel (0) target = $region33
    $region32: #{tpu_custom_call.1} parent=1 // pred_region
      %s72 = ssub.s32 512, 512
      %73 = vsyncadd [#allocation9], %s72
      %s74 = sshll.u32 [#allocation10], 4
      %s75 = int_to_ptr.vmem [resolvable:$true] %s74
      %80 = dma.hbm_to_vmem [thread:$0]  %s7, 512, %s75, [#allocation9], 128, 128, 8
    $region33: #{tpu_custom_call.1} parent=1 // pred_fallthru
      _
    // Predicated region
    $region34: #{tpu_custom_call.1} parent=1 // pred_check
      _
    $region35: #{tpu_custom_call.1} parent=1 // pred_check_branch
      %82 = sbr.rel (0) target = $region37
    $region36: #{tpu_custom_call.1} parent=1 // pred_region
      %s84 = ssub.s32 16, 16
      %85 = vsyncadd [#allocation12], %s84
      %s87 = sshll.u32 [#allocation11], 4
      %s88 = int_to_ptr.vmem [resolvable:$true] %s87
      %90 = dma.hbm_to_vmem [thread:$0]  %s8, 16, %s88, [#allocation12]
    $region37: #{tpu_custom_call.1} parent=1 // pred_fallthru
      _
    // Predicated region
    $region38: #{tpu_custom_call.1} parent=1 // pred_check
      _
    $region39: #{tpu_custom_call.1} parent=1 // pred_check_branch
      %92 = sbr.rel (0) target = $region41
    $region40: #{tpu_custom_call.1} parent=1 // pred_region
      _
    $region41: #{tpu_custom_call.1} parent=1 // pred_fallthru
      _
    // Predicated region
    $region42: #{tpu_custom_call.1} parent=1 // pred_check
      _
    $region43: #{tpu_custom_call.1} parent=1 // pred_check_branch
      %94 = sbr.rel (0) target = $region45
    $region44: #{tpu_custom_call.1} parent=1 // pred_region
      _
    $region45: #{tpu_custom_call.1} parent=1 // pred_fallthru
      _
    // Predicated region
    $region46: #{tpu_custom_call.1} parent=1 // pred_check
      _
    $region47: #{tpu_custom_call.1} parent=1 // pred_check_branch
      %96 = sbr.rel (0) target = $region49
    $region48: #{tpu_custom_call.1} parent=1 // pred_region
      %97 = dma.done [#allocation3], 256
    $region49: #{tpu_custom_call.1} parent=1 // pred_fallthru
      _
    // Predicated region
    $region50: #{tpu_custom_call.1} parent=1 // pred_check
      _
    $region51: #{tpu_custom_call.1} parent=1 // pred_check_branch
      %99 = sbr.rel (0) target = $region53
    $region52: #{tpu_custom_call.1} parent=1 // pred_region
      %100 = dma.done [#allocation6], 16
    $region53: #{tpu_custom_call.1} parent=1 // pred_fallthru
      _
    // Predicated region
    $region54: #{tpu_custom_call.1} parent=1 // pred_check
      _
    $region55: #{tpu_custom_call.1} parent=1 // pred_check_branch
      %102 = sbr.rel (0) target = $region57
    $region56: #{tpu_custom_call.1} parent=1 // pred_region
      %103 = dma.done [#allocation6], 16
    $region57: #{tpu_custom_call.1} parent=1 // pred_fallthru
      _
    // Predicated region
    $region58: #{tpu_custom_call.1} parent=1 // pred_check
      _
    $region59: #{tpu_custom_call.1} parent=1 // pred_check_branch
      %105 = sbr.rel (0) target = $region61
    $region60: #{tpu_custom_call.1} parent=1 // pred_region
      %106 = dma.done [#allocation9], 16
    $region61: #{tpu_custom_call.1} parent=1 // pred_fallthru
      _
    // Predicated region
    $region62: #{tpu_custom_call.1} parent=1 // pred_check
      _
    $region63: #{tpu_custom_call.1} parent=1 // pred_check_branch
      %108 = sbr.rel (0) target = $region65
    $region64: #{tpu_custom_call.1} parent=1 // pred_region
      %109 = dma.done [#allocation9], 512
    $region65: #{tpu_custom_call.1} parent=1 // pred_fallthru
      _
    // Predicated region
    $region66: #{tpu_custom_call.1} parent=1 // pred_check
      _
    $region67: #{tpu_custom_call.1} parent=1 // pred_check_branch
      %111 = sbr.rel (0) target = $region69
    $region68: #{tpu_custom_call.1} parent=1 // pred_region
      %112 = dma.done [#allocation12], 16
    $region69: #{tpu_custom_call.1} parent=1 // pred_fallthru
      _
    %v113 = vld [vmem:[%s0] sm:$0xff]
    %v114 = vld [vmem:[%s0 + $0x8] sm:$0xff]
    %v115 = vld [vmem:[%s0 + $0x10] sm:$0xff]
    %v116 = vld [vmem:[%s0 + $0x18] sm:$0xff]
    %v117 = vld [vmem:[%s0 + $0x20] sm:$0xff]
    %v118 = vld [vmem:[%s0 + $0x28] sm:$0xff]
    %v119 = vld [vmem:[%s0 + $0x30] sm:$0xff]
    %v120 = vld [vmem:[%s0 + $0x38] sm:$0xff]
    %v121 = vld [vmem:[#allocation2] sm:$0xff]
    %v122 = vld [vmem:[#allocation2 + $0x8] sm:$0xff]
    %v123 = vld [vmem:[#allocation5] sm:$0x1]
    %v125 = vlaneseq
    %v126 = vshrl.u32 %v125, 7
    %v127 = vsub.s32 0, %v126
    %v128 = vrot.slane %v123, %v127
    %vm130 = vcmask 130048
    %v132 = vsel %vm130, %v113, 0
    %v135 = vsel %vm130, %v114, 0
    %v138 = vsel %vm130, %v115, 0
    %v141 = vsel %vm130, %v116, 0
    %v144 = vsel %vm130, %v117, 0
    %v147 = vsel %vm130, %v118, 0
    %v150 = vsel %vm130, %v119, 0
    %v153 = vsel %vm130, %v120, 0
    %155 = vmatprep.subr.mxu0 0.0
    %156 = vmatpush1.msra.mxu0 0.0
    %157 = vmatprep.subr.mxu0 0.0
    %158 = vmatpush1.msra.mxu0 0.0
    %159 = vmatprep.subr.mxu0 0.0
    %160 = vmatpush1.msra.mxu0 0.0
    %161 = vmatprep.subr.mxu0 0.0
    %162 = vmatpush1.msra.mxu0 0.0
    %163 = vmatprep.subr.mxu0 0.0
    %164 = vmatpush1.msra.mxu0 0.0
    %165 = vmatprep.subr.mxu0 0.0
    %166 = vmatpush1.msra.mxu0 0.0
    %167 = vmatprep.subr.mxu0 0.0
    %168 = vmatpush1.msra.mxu0 0.0
    %169 = vmatprep.subr.mxu0 0.0
    %170 = vmatpush1.msra.mxu0 0.0
    %171 = vmatprep.subr.mxu0 0.0
    %172 = vmatpush1.msra.mxu0 0.0
    %173 = vmatprep.subr.mxu0 0.0
    %174 = vmatpush1.msra.mxu0 0.0
    %175 = vmatprep.subr.mxu0 0.0
    %176 = vmatpush1.msra.mxu0 0.0
    %177 = vmatprep.subr.mxu0 0.0
    %178 = vmatpush1.msra.mxu0 0.0
    %179 = vmatprep.subr.mxu0 0.0
    %180 = vmatpush1.msra.mxu0 0.0
    %181 = vmatprep.subr.mxu0 0.0
    %182 = vmatpush1.msra.mxu0 0.0
    %183 = vmatprep.subr.mxu0 0.0
    %184 = vmatpush1.msra.mxu0 %v122
    %185 = vmatprep.subr.mxu0 0.0
    %186 = vmatpush1.msra.mxu0 %v121
    %187 = vmatprep.subr.mxu0 0.0
    %188 = vmatpush2.msra.mxu0 0.0
    %189 = vmatprep.subr.mxu0 0.0
    %190 = vmatpush2.msra.mxu0 0.0
    %191 = vmatprep.subr.mxu0 0.0
    %192 = vmatpush2.msra.mxu0 0.0
    %193 = vmatprep.subr.mxu0 0.0
    %194 = vmatpush2.msra.mxu0 0.0
    %195 = vmatprep.subr.mxu0 0.0
    %196 = vmatpush2.msra.mxu0 0.0
    %197 = vmatprep.subr.mxu0 0.0
    %198 = vmatpush2.msra.mxu0 0.0
    %199 = vmatprep.subr.mxu0 0.0
    %200 = vmatpush2.msra.mxu0 0.0
    %201 = vmatprep.subr.mxu0 0.0
    %202 = vmatpush2.msra.mxu0 0.0
    %203 = vmatprep.subr.mxu0 0.0
    %204 = vmatpush2.msra.mxu0 0.0
    %205 = vmatprep.subr.mxu0 0.0
    %206 = vmatpush2.msra.mxu0 0.0
    %207 = vmatprep.subr.mxu0 0.0
    %208 = vmatpush2.msra.mxu0 0.0
    %209 = vmatprep.subr.mxu0 0.0
    %210 = vmatpush2.msra.mxu0 0.0
    %211 = vmatprep.subr.mxu0 0.0
    %212 = vmatpush2.msra.mxu0 0.0
    %213 = vmatprep.subr.mxu0 0.0
    %214 = vmatpush2.msra.mxu0 0.0
    %215 = vmatprep.subr.mxu0 0.0
    %216 = vmatpush2.msra.mxu0 0.0
    %217 = vmatprep.subr.mxu0 0.0
    %218 = vmatpush2.msra.mxu0 0.0
    %219 = vmatprep.mubr.f32.mxu0 0.0
    %220 = vmatmul.mubr.f32.gmra.mxu0 %v132
    %v221 = vpop.f32.mrf.mxu0
    %v222 = vadd.f32 %v128, %v221
    %v223 = vpop.f32.mrf.mxu0
    %224 = vmatprep.mubr.f32.mxu0 0.0
    %225 = vmatmul.mubr.f32.gmra.mxu0 %v135
    %v226 = vpop.f32.mrf.mxu0
    %v227 = vadd.f32 %v128, %v226
    %v228 = vpop.f32.mrf.mxu0
    %229 = vmatprep.mubr.f32.mxu0 0.0
    %230 = vmatmul.mubr.f32.gmra.mxu0 %v138
    %v231 = vpop.f32.mrf.mxu0
    %v232 = vadd.f32 %v128, %v231
    %v233 = vpop.f32.mrf.mxu0
    %234 = vmatprep.mubr.f32.mxu0 0.0
    %235 = vmatmul.mubr.f32.gmra.mxu0 %v141
    %v236 = vpop.f32.mrf.mxu0
    %v237 = vadd.f32 %v128, %v236
    %v238 = vpop.f32.mrf.mxu0
    %239 = vmatprep.mubr.f32.mxu0 0.0
    %240 = vmatmul.mubr.f32.gmra.mxu0 %v144
    %v241 = vpop.f32.mrf.mxu0
    %v242 = vadd.f32 %v128, %v241
    %v243 = vpop.f32.mrf.mxu0
    %244 = vmatprep.mubr.f32.mxu0 0.0
    %245 = vmatmul.mubr.f32.gmra.mxu0 %v147
    %v246 = vpop.f32.mrf.mxu0
    %v247 = vadd.f32 %v128, %v246
    %v248 = vpop.f32.mrf.mxu0
    %249 = vmatprep.mubr.f32.mxu0 0.0
    %250 = vmatmul.mubr.f32.gmra.mxu0 %v150
    %v251 = vpop.f32.mrf.mxu0
    %v252 = vadd.f32 %v128, %v251
    %v253 = vpop.f32.mrf.mxu0
    %254 = vmatprep.mubr.f32.mxu0 0.0
    %255 = vmatmul.mubr.f32.gmra.mxu0 %v153
    %v256 = vpop.f32.mrf.mxu0
    %v257 = vadd.f32 %v128, %v256
    %v258 = vpop.f32.mrf.mxu0
    %259 = vdwg.mxu0
    %v260 = vmax.f32 %v222, 0.0
    %v261 = vmax.f32 %v227, 0.0
    %v262 = vmax.f32 %v232, 0.0
    %v263 = vmax.f32 %v237, 0.0
    %v264 = vmax.f32 %v242, 0.0
    %v265 = vmax.f32 %v247, 0.0
    %v266 = vmax.f32 %v252, 0.0
    %v267 = vmax.f32 %v257, 0.0
    %v268 = vld [vmem:[%s3] sm:$0xff]
    %v269 = vld [vmem:[%s3 + $0x8] sm:$0xff]
    %v270 = vld [vmem:[%s3 + $0x10] sm:$0xff]
    %v271 = vld [vmem:[%s3 + $0x18] sm:$0xff]
    %v272 = vld [vmem:[#allocation7] sm:$0x1]
    %v274 = vlaneseq
    %v275 = vshrl.u32 %v274, 7
    %v276 = vsub.s32 0, %v275
    %v277 = vrot.slane %v272, %v276
    %vm279 = vcmask 261120
    %v281 = vsel %vm279, %v260, 0
    %v284 = vsel %vm279, %v261, 0
    %v287 = vsel %vm279, %v262, 0
    %v290 = vsel %vm279, %v263, 0
    %v293 = vsel %vm279, %v264, 0
    %v296 = vsel %vm279, %v265, 0
    %v299 = vsel %vm279, %v266, 0
    %v302 = vsel %vm279, %v267, 0
    %304 = vmatprep.subr.mxu0 0.0
    %305 = vmatpush1.msra.mxu0 0.0
    %306 = vmatprep.subr.mxu0 0.0
    %307 = vmatpush1.msra.mxu0 0.0
    %308 = vmatprep.subr.mxu0 0.0
    %309 = vmatpush1.msra.mxu0 0.0
    %310 = vmatprep.subr.mxu0 0.0
    %311 = vmatpush1.msra.mxu0 0.0
    %312 = vmatprep.subr.mxu0 0.0
    %313 = vmatpush1.msra.mxu0 0.0
    %314 = vmatprep.subr.mxu0 0.0
    %315 = vmatpush1.msra.mxu0 0.0
    %316 = vmatprep.subr.mxu0 0.0
    %317 = vmatpush1.msra.mxu0 0.0
    %318 = vmatprep.subr.mxu0 0.0
    %319 = vmatpush1.msra.mxu0 0.0
    %320 = vmatprep.subr.mxu0 0.0
    %321 = vmatpush1.msra.mxu0 0.0
    %322 = vmatprep.subr.mxu0 0.0
    %323 = vmatpush1.msra.mxu0 0.0
    %324 = vmatprep.subr.mxu0 0.0
    %325 = vmatpush1.msra.mxu0 0.0
    %326 = vmatprep.subr.mxu0 0.0
    %327 = vmatpush1.msra.mxu0 0.0
    %328 = vmatprep.subr.mxu0 0.0
    %329 = vmatpush1.msra.mxu0 %v271
    %330 = vmatprep.subr.mxu0 0.0
    %331 = vmatpush1.msra.mxu0 %v270
    %332 = vmatprep.subr.mxu0 0.0
    %333 = vmatpush1.msra.mxu0 %v269
    %334 = vmatprep.subr.mxu0 0.0
    %335 = vmatpush1.msra.mxu0 %v268
    %336 = vmatprep.subr.mxu0 0.0
    %337 = vmatpush2.msra.mxu0 0.0
    %338 = vmatprep.subr.mxu0 0.0
    %339 = vmatpush2.msra.mxu0 0.0
    %340 = vmatprep.subr.mxu0 0.0
    %341 = vmatpush2.msra.mxu0 0.0
    %342 = vmatprep.subr.mxu0 0.0
    %343 = vmatpush2.msra.mxu0 0.0
    %344 = vmatprep.subr.mxu0 0.0
    %345 = vmatpush2.msra.mxu0 0.0
    %346 = vmatprep.subr.mxu0 0.0
    %347 = vmatpush2.msra.mxu0 0.0
    %348 = vmatprep.subr.mxu0 0.0
    %349 = vmatpush2.msra.mxu0 0.0
    %350 = vmatprep.subr.mxu0 0.0
    %351 = vmatpush2.msra.mxu0 0.0
    %352 = vmatprep.subr.mxu0 0.0
    %353 = vmatpush2.msra.mxu0 0.0
    %354 = vmatprep.subr.mxu0 0.0
    %355 = vmatpush2.msra.mxu0 0.0
    %356 = vmatprep.subr.mxu0 0.0
    %357 = vmatpush2.msra.mxu0 0.0
    %358 = vmatprep.subr.mxu0 0.0
    %359 = vmatpush2.msra.mxu0 0.0
    %360 = vmatprep.subr.mxu0 0.0
    %361 = vmatpush2.msra.mxu0 0.0
    %362 = vmatprep.subr.mxu0 0.0
    %363 = vmatpush2.msra.mxu0 0.0
    %364 = vmatprep.subr.mxu0 0.0
    %365 = vmatpush2.msra.mxu0 0.0
    %366 = vmatprep.subr.mxu0 0.0
    %367 = vmatpush2.msra.mxu0 0.0
    %368 = vmatprep.mubr.f32.mxu0 0.0
    %369 = vmatmul.mubr.f32.gmra.mxu0 %v281
    %v370 = vpop.f32.mrf.mxu0
    %v371 = vadd.f32 %v277, %v370
    %v372 = vpop.f32.mrf.mxu0
    %373 = vmatprep.mubr.f32.mxu0 0.0
    %374 = vmatmul.mubr.f32.gmra.mxu0 %v284
    %v375 = vpop.f32.mrf.mxu0
    %v376 = vadd.f32 %v277, %v375
    %v377 = vpop.f32.mrf.mxu0
    %378 = vmatprep.mubr.f32.mxu0 0.0
    %379 = vmatmul.mubr.f32.gmra.mxu0 %v287
    %v380 = vpop.f32.mrf.mxu0
    %v381 = vadd.f32 %v277, %v380
    %v382 = vpop.f32.mrf.mxu0
    %383 = vmatprep.mubr.f32.mxu0 0.0
    %384 = vmatmul.mubr.f32.gmra.mxu0 %v290
    %v385 = vpop.f32.mrf.mxu0
    %v386 = vadd.f32 %v277, %v385
    %v387 = vpop.f32.mrf.mxu0
    %388 = vmatprep.mubr.f32.mxu0 0.0
    %389 = vmatmul.mubr.f32.gmra.mxu0 %v293
    %v390 = vpop.f32.mrf.mxu0
    %v391 = vadd.f32 %v277, %v390
    %v392 = vpop.f32.mrf.mxu0
    %393 = vmatprep.mubr.f32.mxu0 0.0
    %394 = vmatmul.mubr.f32.gmra.mxu0 %v296
    %v395 = vpop.f32.mrf.mxu0
    %v396 = vadd.f32 %v277, %v395
    %v397 = vpop.f32.mrf.mxu0
    %398 = vmatprep.mubr.f32.mxu0 0.0
    %399 = vmatmul.mubr.f32.gmra.mxu0 %v299
    %v400 = vpop.f32.mrf.mxu0
    %v401 = vadd.f32 %v277, %v400
    %v402 = vpop.f32.mrf.mxu0
    %403 = vmatprep.mubr.f32.mxu0 0.0
    %404 = vmatmul.mubr.f32.gmra.mxu0 %v302
    %v405 = vpop.f32.mrf.mxu0
    %v406 = vadd.f32 %v277, %v405
    %v407 = vpop.f32.mrf.mxu0
    %408 = vdwg.mxu0
    %v409 = vld [vmem:[%s5] sm:$0xff]
    %v410 = vld [vmem:[%s5 + $0x8] sm:$0xff]
    %v411 = vld [vmem:[%s5 + $0x10] sm:$0xff]
    %v412 = vld [vmem:[%s5 + $0x18] sm:$0xff]
    %v413 = vld [vmem:[#allocation8] sm:$0x1]
    %v415 = vlaneseq
    %v416 = vshrl.u32 %v415, 7
    %v417 = vsub.s32 0, %v416
    %v418 = vrot.slane %v413, %v417
    %v420 = vsel %vm279, 0.0, 0
    %422 = vmatprep.subr.mxu0 0.0
    %423 = vmatpush1.msra.mxu0 0.0
    %424 = vmatprep.subr.mxu0 0.0
    %425 = vmatpush1.msra.mxu0 0.0
    %426 = vmatprep.subr.mxu0 0.0
    %427 = vmatpush1.msra.mxu0 0.0
    %428 = vmatprep.subr.mxu0 0.0
    %429 = vmatpush1.msra.mxu0 0.0
    %430 = vmatprep.subr.mxu0 0.0
    %431 = vmatpush1.msra.mxu0 0.0
    %432 = vmatprep.subr.mxu0 0.0
    %433 = vmatpush1.msra.mxu0 0.0
    %434 = vmatprep.subr.mxu0 0.0
    %435 = vmatpush1.msra.mxu0 0.0
    %436 = vmatprep.subr.mxu0 0.0
    %437 = vmatpush1.msra.mxu0 0.0
    %438 = vmatprep.subr.mxu0 0.0
    %439 = vmatpush1.msra.mxu0 0.0
    %440 = vmatprep.subr.mxu0 0.0
    %441 = vmatpush1.msra.mxu0 0.0
    %442 = vmatprep.subr.mxu0 0.0
    %443 = vmatpush1.msra.mxu0 0.0
    %444 = vmatprep.subr.mxu0 0.0
    %445 = vmatpush1.msra.mxu0 0.0
    %446 = vmatprep.subr.mxu0 0.0
    %447 = vmatpush1.msra.mxu0 %v412
    %448 = vmatprep.subr.mxu0 0.0
    %449 = vmatpush1.msra.mxu0 %v411
    %450 = vmatprep.subr.mxu0 0.0
    %451 = vmatpush1.msra.mxu0 %v410
    %452 = vmatprep.subr.mxu0 0.0
    %453 = vmatpush1.msra.mxu0 %v409
    %454 = vmatprep.subr.mxu0 0.0
    %455 = vmatpush2.msra.mxu0 0.0
    %456 = vmatprep.subr.mxu0 0.0
    %457 = vmatpush2.msra.mxu0 0.0
    %458 = vmatprep.subr.mxu0 0.0
    %459 = vmatpush2.msra.mxu0 0.0
    %460 = vmatprep.subr.mxu0 0.0
    %461 = vmatpush2.msra.mxu0 0.0
    %462 = vmatprep.subr.mxu0 0.0
    %463 = vmatpush2.msra.mxu0 0.0
    %464 = vmatprep.subr.mxu0 0.0
    %465 = vmatpush2.msra.mxu0 0.0
    %466 = vmatprep.subr.mxu0 0.0
    %467 = vmatpush2.msra.mxu0 0.0
    %468 = vmatprep.subr.mxu0 0.0
    %469 = vmatpush2.msra.mxu0 0.0
    %470 = vmatprep.subr.mxu0 0.0
    %471 = vmatpush2.msra.mxu0 0.0
    %472 = vmatprep.subr.mxu0 0.0
    %473 = vmatpush2.msra.mxu0 0.0
    %474 = vmatprep.subr.mxu0 0.0
    %475 = vmatpush2.msra.mxu0 0.0
    %476 = vmatprep.subr.mxu0 0.0
    %477 = vmatpush2.msra.mxu0 0.0
    %478 = vmatprep.subr.mxu0 0.0
    %479 = vmatpush2.msra.mxu0 0.0
    %480 = vmatprep.subr.mxu0 0.0
    %481 = vmatpush2.msra.mxu0 0.0
    %482 = vmatprep.subr.mxu0 0.0
    %483 = vmatpush2.msra.mxu0 0.0
    %484 = vmatprep.subr.mxu0 0.0
    %485 = vmatpush2.msra.mxu0 0.0
    %486 = vmatprep.mubr.f32.mxu0 0.0
    %487 = vmatmul.mubr.f32.gmra.mxu0 %v420
    %v488 = vpop.f32.mrf.mxu0
    %v489 = vadd.f32 0.0, %v488
    %v490 = vpop.f32.mrf.mxu0
    %491 = vdwg.mxu0
    %v492 = vadd.f32 %v371, %v489
    %v493 = vxor.u32 %v492, 2147483648
    %v494 = vmul.f32 %v493, 1.442695
    %v495 = vpow.pop %v494
    %v496 = vadd.f32 %v495, 1.0
    %v497 = vrcp.pop %v496
    %v498 = vmul.f32 1.0, %v497
    %499 = vrot.lane.b32.xlu0 %v418, 64
    %v500 = vpop.permute.xlu0 %499
    %v502 = vadd.f32 %v489, %v500
    %504 = vrot.lane.b32.xlu0 %v502, 64
    %v505 = vpop.permute.xlu0 %504
    %v507 = vmul.f32 %v498, %v505
    %509 = vrot.lane.b32.xlu0 %v507, 64
    %v510 = vpop.permute.xlu0 %509
    %v512 = vadd.f32 %v371, %v510
    %v513 = vtanh.pop %v512
    %v514 = vsub.f32 0.0, %v513
    %516 = vrot.lane.b32.xlu0 %v514, 96
    %v517 = vpop.permute.xlu0 %516
    %v519 = vmul.f32 %v498, %v517
    %521 = vrot.lane.b32.xlu0 %v519, 32
    %v522 = vpop.permute.xlu0 %521
    %v524 = vadd.f32 %v513, %v522
    %526 = vrot.lane.b32.xlu0 %v524, 64
    %v527 = vpop.permute.xlu0 %526
    %v528 = vsel %vm279, %v527, 0
    %530 = vmatprep.subr.mxu0 0.0
    %531 = vmatpush1.msra.mxu0 0.0
    %532 = vmatprep.subr.mxu0 0.0
    %533 = vmatpush1.msra.mxu0 0.0
    %534 = vmatprep.subr.mxu0 0.0
    %535 = vmatpush1.msra.mxu0 0.0
    %536 = vmatprep.subr.mxu0 0.0
    %537 = vmatpush1.msra.mxu0 0.0
    %538 = vmatprep.subr.mxu0 0.0
    %539 = vmatpush1.msra.mxu0 0.0
    %540 = vmatprep.subr.mxu0 0.0
    %541 = vmatpush1.msra.mxu0 0.0
    %542 = vmatprep.subr.mxu0 0.0
    %543 = vmatpush1.msra.mxu0 0.0
    %544 = vmatprep.subr.mxu0 0.0
    %545 = vmatpush1.msra.mxu0 0.0
    %546 = vmatprep.subr.mxu0 0.0
    %547 = vmatpush1.msra.mxu0 0.0
    %548 = vmatprep.subr.mxu0 0.0
    %549 = vmatpush1.msra.mxu0 0.0
    %550 = vmatprep.subr.mxu0 0.0
    %551 = vmatpush1.msra.mxu0 0.0
    %552 = vmatprep.subr.mxu0 0.0
    %553 = vmatpush1.msra.mxu0 0.0
    %554 = vmatprep.subr.mxu0 0.0
    %555 = vmatpush1.msra.mxu0 %v412
    %556 = vmatprep.subr.mxu0 0.0
    %557 = vmatpush1.msra.mxu0 %v411
    %558 = vmatprep.subr.mxu0 0.0
    %559 = vmatpush1.msra.mxu0 %v410
    %560 = vmatprep.subr.mxu0 0.0
    %561 = vmatpush1.msra.mxu0 %v409
    %562 = vmatprep.subr.mxu0 0.0
    %563 = vmatpush2.msra.mxu0 0.0
    %564 = vmatprep.subr.mxu0 0.0
    %565 = vmatpush2.msra.mxu0 0.0
    %566 = vmatprep.subr.mxu0 0.0
    %567 = vmatpush2.msra.mxu0 0.0
    %568 = vmatprep.subr.mxu0 0.0
    %569 = vmatpush2.msra.mxu0 0.0
    %570 = vmatprep.subr.mxu0 0.0
    %571 = vmatpush2.msra.mxu0 0.0
    %572 = vmatprep.subr.mxu0 0.0
    %573 = vmatpush2.msra.mxu0 0.0
    %574 = vmatprep.subr.mxu0 0.0
    %575 = vmatpush2.msra.mxu0 0.0
    %576 = vmatprep.subr.mxu0 0.0
    %577 = vmatpush2.msra.mxu0 0.0
    %578 = vmatprep.subr.mxu0 0.0
    %579 = vmatpush2.msra.mxu0 0.0
    %580 = vmatprep.subr.mxu0 0.0
    %581 = vmatpush2.msra.mxu0 0.0
    %582 = vmatprep.subr.mxu0 0.0
    %583 = vmatpush2.msra.mxu0 0.0
    %584 = vmatprep.subr.mxu0 0.0
    %585 = vmatpush2.msra.mxu0 0.0
    %586 = vmatprep.subr.mxu0 0.0
    %587 = vmatpush2.msra.mxu0 0.0
    %588 = vmatprep.subr.mxu0 0.0
    %589 = vmatpush2.msra.mxu0 0.0
    %590 = vmatprep.subr.mxu0 0.0
    %591 = vmatpush2.msra.mxu0 0.0
    %592 = vmatprep.subr.mxu0 0.0
    %593 = vmatpush2.msra.mxu0 0.0
    %594 = vmatprep.mubr.f32.mxu0 0.0
    %595 = vmatmul.mubr.f32.gmra.mxu0 %v528
    %v596 = vpop.f32.mrf.mxu0
    %v597 = vadd.f32 0.0, %v596
    %v598 = vpop.f32.mrf.mxu0
    %599 = vdwg.mxu0
    %v600 = vadd.f32 %v376, %v597
    %v601 = vxor.u32 %v600, 2147483648
    %v602 = vmul.f32 %v601, 1.442695
    %v603 = vpow.pop %v602
    %v604 = vadd.f32 %v603, 1.0
    %v605 = vrcp.pop %v604
    %v606 = vmul.f32 1.0, %v605
    %v607 = vadd.f32 %v597, %v500
    %609 = vrot.lane.b32.xlu0 %v607, 64
    %v610 = vpop.permute.xlu0 %609
    %v612 = vmul.f32 %v606, %v610
    %614 = vrot.lane.b32.xlu0 %v612, 64
    %v615 = vpop.permute.xlu0 %614
    %v617 = vadd.f32 %v376, %v615
    %v618 = vtanh.pop %v617
    %v619 = vsub.f32 %v524, %v618
    %621 = vrot.lane.b32.xlu0 %v619, 96
    %v622 = vpop.permute.xlu0 %621
    %v624 = vmul.f32 %v606, %v622
    %626 = vrot.lane.b32.xlu0 %v624, 32
    %v627 = vpop.permute.xlu0 %626
    %v629 = vadd.f32 %v618, %v627
    %631 = vrot.lane.b32.xlu0 %v629, 64
    %v632 = vpop.permute.xlu0 %631
    %v633 = vsel %vm279, %v632, 0
    %635 = vmatprep.subr.mxu0 0.0
    %636 = vmatpush1.msra.mxu0 0.0
    %637 = vmatprep.subr.mxu0 0.0
    %638 = vmatpush1.msra.mxu0 0.0
    %639 = vmatprep.subr.mxu0 0.0
    %640 = vmatpush1.msra.mxu0 0.0
    %641 = vmatprep.subr.mxu0 0.0
    %642 = vmatpush1.msra.mxu0 0.0
    %643 = vmatprep.subr.mxu0 0.0
    %644 = vmatpush1.msra.mxu0 0.0
    %645 = vmatprep.subr.mxu0 0.0
    %646 = vmatpush1.msra.mxu0 0.0
    %647 = vmatprep.subr.mxu0 0.0
    %648 = vmatpush1.msra.mxu0 0.0
    %649 = vmatprep.subr.mxu0 0.0
    %650 = vmatpush1.msra.mxu0 0.0
    %651 = vmatprep.subr.mxu0 0.0
    %652 = vmatpush1.msra.mxu0 0.0
    %653 = vmatprep.subr.mxu0 0.0
    %654 = vmatpush1.msra.mxu0 0.0
    %655 = vmatprep.subr.mxu0 0.0
    %656 = vmatpush1.msra.mxu0 0.0
    %657 = vmatprep.subr.mxu0 0.0
    %658 = vmatpush1.msra.mxu0 0.0
    %659 = vmatprep.subr.mxu0 0.0
    %660 = vmatpush1.msra.mxu0 %v412
    %661 = vmatprep.subr.mxu0 0.0
    %662 = vmatpush1.msra.mxu0 %v411
    %663 = vmatprep.subr.mxu0 0.0
    %664 = vmatpush1.msra.mxu0 %v410
    %665 = vmatprep.subr.mxu0 0.0
    %666 = vmatpush1.msra.mxu0 %v409
    %667 = vmatprep.subr.mxu0 0.0
    %668 = vmatpush2.msra.mxu0 0.0
    %669 = vmatprep.subr.mxu0 0.0
    %670 = vmatpush2.msra.mxu0 0.0
    %671 = vmatprep.subr.mxu0 0.0
    %672 = vmatpush2.msra.mxu0 0.0
    %673 = vmatprep.subr.mxu0 0.0
    %674 = vmatpush2.msra.mxu0 0.0
    %675 = vmatprep.subr.mxu0 0.0
    %676 = vmatpush2.msra.mxu0 0.0
    %677 = vmatprep.subr.mxu0 0.0
    %678 = vmatpush2.msra.mxu0 0.0
    %679 = vmatprep.subr.mxu0 0.0
    %680 = vmatpush2.msra.mxu0 0.0
    %681 = vmatprep.subr.mxu0 0.0
    %682 = vmatpush2.msra.mxu0 0.0
    %683 = vmatprep.subr.mxu0 0.0
    %684 = vmatpush2.msra.mxu0 0.0
    %685 = vmatprep.subr.mxu0 0.0
    %686 = vmatpush2.msra.mxu0 0.0
    %687 = vmatprep.subr.mxu0 0.0
    %688 = vmatpush2.msra.mxu0 0.0
    %689 = vmatprep.subr.mxu0 0.0
    %690 = vmatpush2.msra.mxu0 0.0
    %691 = vmatprep.subr.mxu0 0.0
    %692 = vmatpush2.msra.mxu0 0.0
    %693 = vmatprep.subr.mxu0 0.0
    %694 = vmatpush2.msra.mxu0 0.0
    %695 = vmatprep.subr.mxu0 0.0
    %696 = vmatpush2.msra.mxu0 0.0
    %697 = vmatprep.subr.mxu0 0.0
    %698 = vmatpush2.msra.mxu0 0.0
    %699 = vmatprep.mubr.f32.mxu0 0.0
    %700 = vmatmul.mubr.f32.gmra.mxu0 %v633
    %v701 = vpop.f32.mrf.mxu0
    %v702 = vadd.f32 0.0, %v701
    %v703 = vpop.f32.mrf.mxu0
    %704 = vdwg.mxu0
    %v705 = vadd.f32 %v381, %v702
    %v706 = vxor.u32 %v705, 2147483648
    %v707 = vmul.f32 %v706, 1.442695
    %v708 = vpow.pop %v707
    %v709 = vadd.f32 %v708, 1.0
    %v710 = vrcp.pop %v709
    %v711 = vmul.f32 1.0, %v710
    %v712 = vadd.f32 %v702, %v500
    %714 = vrot.lane.b32.xlu0 %v712, 64
    %v715 = vpop.permute.xlu0 %714
    %v717 = vmul.f32 %v711, %v715
    %719 = vrot.lane.b32.xlu0 %v717, 64
    %v720 = vpop.permute.xlu0 %719
    %v722 = vadd.f32 %v381, %v720
    %v723 = vtanh.pop %v722
    %v724 = vsub.f32 %v629, %v723
    %726 = vrot.lane.b32.xlu0 %v724, 96
    %v727 = vpop.permute.xlu0 %726
    %v729 = vmul.f32 %v711, %v727
    %731 = vrot.lane.b32.xlu0 %v729, 32
    %v732 = vpop.permute.xlu0 %731
    %v734 = vadd.f32 %v723, %v732
    %736 = vrot.lane.b32.xlu0 %v734, 64
    %v737 = vpop.permute.xlu0 %736
    %v738 = vsel %vm279, %v737, 0
    %740 = vmatprep.subr.mxu0 0.0
    %741 = vmatpush1.msra.mxu0 0.0
    %742 = vmatprep.subr.mxu0 0.0
    %743 = vmatpush1.msra.mxu0 0.0
    %744 = vmatprep.subr.mxu0 0.0
    %745 = vmatpush1.msra.mxu0 0.0
    %746 = vmatprep.subr.mxu0 0.0
    %747 = vmatpush1.msra.mxu0 0.0
    %748 = vmatprep.subr.mxu0 0.0
    %749 = vmatpush1.msra.mxu0 0.0
    %750 = vmatprep.subr.mxu0 0.0
    %751 = vmatpush1.msra.mxu0 0.0
    %752 = vmatprep.subr.mxu0 0.0
    %753 = vmatpush1.msra.mxu0 0.0
    %754 = vmatprep.subr.mxu0 0.0
    %755 = vmatpush1.msra.mxu0 0.0
    %756 = vmatprep.subr.mxu0 0.0
    %757 = vmatpush1.msra.mxu0 0.0
    %758 = vmatprep.subr.mxu0 0.0
    %759 = vmatpush1.msra.mxu0 0.0
    %760 = vmatprep.subr.mxu0 0.0
    %761 = vmatpush1.msra.mxu0 0.0
    %762 = vmatprep.subr.mxu0 0.0
    %763 = vmatpush1.msra.mxu0 0.0
    %764 = vmatprep.subr.mxu0 0.0
    %765 = vmatpush1.msra.mxu0 %v412
    %766 = vmatprep.subr.mxu0 0.0
    %767 = vmatpush1.msra.mxu0 %v411
    %768 = vmatprep.subr.mxu0 0.0
    %769 = vmatpush1.msra.mxu0 %v410
    %770 = vmatprep.subr.mxu0 0.0
    %771 = vmatpush1.msra.mxu0 %v409
    %772 = vmatprep.subr.mxu0 0.0
    %773 = vmatpush2.msra.mxu0 0.0
    %774 = vmatprep.subr.mxu0 0.0
    %775 = vmatpush2.msra.mxu0 0.0
    %776 = vmatprep.subr.mxu0 0.0
    %777 = vmatpush2.msra.mxu0 0.0
    %778 = vmatprep.subr.mxu0 0.0
    %779 = vmatpush2.msra.mxu0 0.0
    %780 = vmatprep.subr.mxu0 0.0
    %781 = vmatpush2.msra.mxu0 0.0
    %782 = vmatprep.subr.mxu0 0.0
    %783 = vmatpush2.msra.mxu0 0.0
    %784 = vmatprep.subr.mxu0 0.0
    %785 = vmatpush2.msra.mxu0 0.0
    %786 = vmatprep.subr.mxu0 0.0
    %787 = vmatpush2.msra.mxu0 0.0
    %788 = vmatprep.subr.mxu0 0.0
    %789 = vmatpush2.msra.mxu0 0.0
    %790 = vmatprep.subr.mxu0 0.0
    %791 = vmatpush2.msra.mxu0 0.0
    %792 = vmatprep.subr.mxu0 0.0
    %793 = vmatpush2.msra.mxu0 0.0
    %794 = vmatprep.subr.mxu0 0.0
    %795 = vmatpush2.msra.mxu0 0.0
    %796 = vmatprep.subr.mxu0 0.0
    %797 = vmatpush2.msra.mxu0 0.0
    %798 = vmatprep.subr.mxu0 0.0
    %799 = vmatpush2.msra.mxu0 0.0
    %800 = vmatprep.subr.mxu0 0.0
    %801 = vmatpush2.msra.mxu0 0.0
    %802 = vmatprep.subr.mxu0 0.0
    %803 = vmatpush2.msra.mxu0 0.0
    %804 = vmatprep.mubr.f32.mxu0 0.0
    %805 = vmatmul.mubr.f32.gmra.mxu0 %v738
    %v806 = vpop.f32.mrf.mxu0
    %v807 = vadd.f32 0.0, %v806
    %v808 = vpop.f32.mrf.mxu0
    %809 = vdwg.mxu0
    %v810 = vadd.f32 %v386, %v807
    %v811 = vxor.u32 %v810, 2147483648
    %v812 = vmul.f32 %v811, 1.442695
    %v813 = vpow.pop %v812
    %v814 = vadd.f32 %v813, 1.0
    %v815 = vrcp.pop %v814
    %v816 = vmul.f32 1.0, %v815
    %v817 = vadd.f32 %v807, %v500
    %819 = vrot.lane.b32.xlu0 %v817, 64
    %v820 = vpop.permute.xlu0 %819
    %v822 = vmul.f32 %v816, %v820
    %824 = vrot.lane.b32.xlu0 %v822, 64
    %v825 = vpop.permute.xlu0 %824
    %v827 = vadd.f32 %v386, %v825
    %v828 = vtanh.pop %v827
    %v829 = vsub.f32 %v734, %v828
    %831 = vrot.lane.b32.xlu0 %v829, 96
    %v832 = vpop.permute.xlu0 %831
    %v834 = vmul.f32 %v816, %v832
    %836 = vrot.lane.b32.xlu0 %v834, 32
    %v837 = vpop.permute.xlu0 %836
    %v839 = vadd.f32 %v828, %v837
    %841 = vrot.lane.b32.xlu0 %v839, 64
    %v842 = vpop.permute.xlu0 %841
    %v843 = vsel %vm279, %v842, 0
    %845 = vmatprep.subr.mxu0 0.0
    %846 = vmatpush1.msra.mxu0 0.0
    %847 = vmatprep.subr.mxu0 0.0
    %848 = vmatpush1.msra.mxu0 0.0
    %849 = vmatprep.subr.mxu0 0.0
    %850 = vmatpush1.msra.mxu0 0.0
    %851 = vmatprep.subr.mxu0 0.0
    %852 = vmatpush1.msra.mxu0 0.0
    %853 = vmatprep.subr.mxu0 0.0
    %854 = vmatpush1.msra.mxu0 0.0
    %855 = vmatprep.subr.mxu0 0.0
    %856 = vmatpush1.msra.mxu0 0.0
    %857 = vmatprep.subr.mxu0 0.0
    %858 = vmatpush1.msra.mxu0 0.0
    %859 = vmatprep.subr.mxu0 0.0
    %860 = vmatpush1.msra.mxu0 0.0
    %861 = vmatprep.subr.mxu0 0.0
    %862 = vmatpush1.msra.mxu0 0.0
    %863 = vmatprep.subr.mxu0 0.0
    %864 = vmatpush1.msra.mxu0 0.0
    %865 = vmatprep.subr.mxu0 0.0
    %866 = vmatpush1.msra.mxu0 0.0
    %867 = vmatprep.subr.mxu0 0.0
    %868 = vmatpush1.msra.mxu0 0.0
    %869 = vmatprep.subr.mxu0 0.0
    %870 = vmatpush1.msra.mxu0 %v412
    %871 = vmatprep.subr.mxu0 0.0
    %872 = vmatpush1.msra.mxu0 %v411
    %873 = vmatprep.subr.mxu0 0.0
    %874 = vmatpush1.msra.mxu0 %v410
    %875 = vmatprep.subr.mxu0 0.0
    %876 = vmatpush1.msra.mxu0 %v409
    %877 = vmatprep.subr.mxu0 0.0
    %878 = vmatpush2.msra.mxu0 0.0
    %879 = vmatprep.subr.mxu0 0.0
    %880 = vmatpush2.msra.mxu0 0.0
    %881 = vmatprep.subr.mxu0 0.0
    %882 = vmatpush2.msra.mxu0 0.0
    %883 = vmatprep.subr.mxu0 0.0
    %884 = vmatpush2.msra.mxu0 0.0
    %885 = vmatprep.subr.mxu0 0.0
    %886 = vmatpush2.msra.mxu0 0.0
    %887 = vmatprep.subr.mxu0 0.0
    %888 = vmatpush2.msra.mxu0 0.0
    %889 = vmatprep.subr.mxu0 0.0
    %890 = vmatpush2.msra.mxu0 0.0
    %891 = vmatprep.subr.mxu0 0.0
    %892 = vmatpush2.msra.mxu0 0.0
    %893 = vmatprep.subr.mxu0 0.0
    %894 = vmatpush2.msra.mxu0 0.0
    %895 = vmatprep.subr.mxu0 0.0
    %896 = vmatpush2.msra.mxu0 0.0
    %897 = vmatprep.subr.mxu0 0.0
    %898 = vmatpush2.msra.mxu0 0.0
    %899 = vmatprep.subr.mxu0 0.0
    %900 = vmatpush2.msra.mxu0 0.0
    %901 = vmatprep.subr.mxu0 0.0
    %902 = vmatpush2.msra.mxu0 0.0
    %903 = vmatprep.subr.mxu0 0.0
    %904 = vmatpush2.msra.mxu0 0.0
    %905 = vmatprep.subr.mxu0 0.0
    %906 = vmatpush2.msra.mxu0 0.0
    %907 = vmatprep.subr.mxu0 0.0
    %908 = vmatpush2.msra.mxu0 0.0
    %909 = vmatprep.mubr.f32.mxu0 0.0
    %910 = vmatmul.mubr.f32.gmra.mxu0 %v843
    %v911 = vpop.f32.mrf.mxu0
    %v912 = vadd.f32 0.0, %v911
    %v913 = vpop.f32.mrf.mxu0
    %914 = vdwg.mxu0
    %v915 = vadd.f32 %v391, %v912
    %v916 = vxor.u32 %v915, 2147483648
    %v917 = vmul.f32 %v916, 1.442695
    %v918 = vpow.pop %v917
    %v919 = vadd.f32 %v918, 1.0
    %v920 = vrcp.pop %v919
    %v921 = vmul.f32 1.0, %v920
    %v922 = vadd.f32 %v912, %v500
    %924 = vrot.lane.b32.xlu0 %v922, 64
    %v925 = vpop.permute.xlu0 %924
    %v927 = vmul.f32 %v921, %v925
    %929 = vrot.lane.b32.xlu0 %v927, 64
    %v930 = vpop.permute.xlu0 %929
    %v932 = vadd.f32 %v391, %v930
    %v933 = vtanh.pop %v932
    %v934 = vsub.f32 %v839, %v933
    %936 = vrot.lane.b32.xlu0 %v934, 96
    %v937 = vpop.permute.xlu0 %936
    %v939 = vmul.f32 %v921, %v937
    %941 = vrot.lane.b32.xlu0 %v939, 32
    %v942 = vpop.permute.xlu0 %941
    %v944 = vadd.f32 %v933, %v942
    %946 = vrot.lane.b32.xlu0 %v944, 64
    %v947 = vpop.permute.xlu0 %946
    %v948 = vsel %vm279, %v947, 0
    %950 = vmatprep.subr.mxu0 0.0
    %951 = vmatpush1.msra.mxu0 0.0
    %952 = vmatprep.subr.mxu0 0.0
    %953 = vmatpush1.msra.mxu0 0.0
    %954 = vmatprep.subr.mxu0 0.0
    %955 = vmatpush1.msra.mxu0 0.0
    %956 = vmatprep.subr.mxu0 0.0
    %957 = vmatpush1.msra.mxu0 0.0
    %958 = vmatprep.subr.mxu0 0.0
    %959 = vmatpush1.msra.mxu0 0.0
    %960 = vmatprep.subr.mxu0 0.0
    %961 = vmatpush1.msra.mxu0 0.0
    %962 = vmatprep.subr.mxu0 0.0
    %963 = vmatpush1.msra.mxu0 0.0
    %964 = vmatprep.subr.mxu0 0.0
    %965 = vmatpush1.msra.mxu0 0.0
    %966 = vmatprep.subr.mxu0 0.0
    %967 = vmatpush1.msra.mxu0 0.0
    %968 = vmatprep.subr.mxu0 0.0
    %969 = vmatpush1.msra.mxu0 0.0
    %970 = vmatprep.subr.mxu0 0.0
    %971 = vmatpush1.msra.mxu0 0.0
    %972 = vmatprep.subr.mxu0 0.0
    %973 = vmatpush1.msra.mxu0 0.0
    %974 = vmatprep.subr.mxu0 0.0
    %975 = vmatpush1.msra.mxu0 %v412
    %976 = vmatprep.subr.mxu0 0.0
    %977 = vmatpush1.msra.mxu0 %v411
    %978 = vmatprep.subr.mxu0 0.0
    %979 = vmatpush1.msra.mxu0 %v410
    %980 = vmatprep.subr.mxu0 0.0
    %981 = vmatpush1.msra.mxu0 %v409
    %982 = vmatprep.subr.mxu0 0.0
    %983 = vmatpush2.msra.mxu0 0.0
    %984 = vmatprep.subr.mxu0 0.0
    %985 = vmatpush2.msra.mxu0 0.0
    %986 = vmatprep.subr.mxu0 0.0
    %987 = vmatpush2.msra.mxu0 0.0
    %988 = vmatprep.subr.mxu0 0.0
    %989 = vmatpush2.msra.mxu0 0.0
    %990 = vmatprep.subr.mxu0 0.0
    %991 = vmatpush2.msra.mxu0 0.0
    %992 = vmatprep.subr.mxu0 0.0
    %993 = vmatpush2.msra.mxu0 0.0
    %994 = vmatprep.subr.mxu0 0.0
    %995 = vmatpush2.msra.mxu0 0.0
    %996 = vmatprep.subr.mxu0 0.0
    %997 = vmatpush2.msra.mxu0 0.0
    %998 = vmatprep.subr.mxu0 0.0
    %999 = vmatpush2.msra.mxu0 0.0
    %1000 = vmatprep.subr.mxu0 0.0
    %1001 = vmatpush2.msra.mxu0 0.0
    %1002 = vmatprep.subr.mxu0 0.0
    %1003 = vmatpush2.msra.mxu0 0.0
    %1004 = vmatprep.subr.mxu0 0.0
    %1005 = vmatpush2.msra.mxu0 0.0
    %1006 = vmatprep.subr.mxu0 0.0
    %1007 = vmatpush2.msra.mxu0 0.0
    %1008 = vmatprep.subr.mxu0 0.0
    %1009 = vmatpush2.msra.mxu0 0.0
    %1010 = vmatprep.subr.mxu0 0.0
    %1011 = vmatpush2.msra.mxu0 0.0
    %1012 = vmatprep.subr.mxu0 0.0
    %1013 = vmatpush2.msra.mxu0 0.0
    %1014 = vmatprep.mubr.f32.mxu0 0.0
    %1015 = vmatmul.mubr.f32.gmra.mxu0 %v948
    %v1016 = vpop.f32.mrf.mxu0
    %v1017 = vadd.f32 0.0, %v1016
    %v1018 = vpop.f32.mrf.mxu0
    %1019 = vdwg.mxu0
    %v1020 = vadd.f32 %v396, %v1017
    %v1021 = vxor.u32 %v1020, 2147483648
    %v1022 = vmul.f32 %v1021, 1.442695
    %v1023 = vpow.pop %v1022
    %v1024 = vadd.f32 %v1023, 1.0
    %v1025 = vrcp.pop %v1024
    %v1026 = vmul.f32 1.0, %v1025
    %v1027 = vadd.f32 %v1017, %v500
    %1029 = vrot.lane.b32.xlu0 %v1027, 64
    %v1030 = vpop.permute.xlu0 %1029
    %v1032 = vmul.f32 %v1026, %v1030
    %1034 = vrot.lane.b32.xlu0 %v1032, 64
    %v1035 = vpop.permute.xlu0 %1034
    %v1037 = vadd.f32 %v396, %v1035
    %v1038 = vtanh.pop %v1037
    %v1039 = vsub.f32 %v944, %v1038
    %1041 = vrot.lane.b32.xlu0 %v1039, 96
    %v1042 = vpop.permute.xlu0 %1041
    %v1044 = vmul.f32 %v1026, %v1042
    %1046 = vrot.lane.b32.xlu0 %v1044, 32
    %v1047 = vpop.permute.xlu0 %1046
    %v1049 = vadd.f32 %v1038, %v1047
    %1051 = vrot.lane.b32.xlu0 %v1049, 64
    %v1052 = vpop.permute.xlu0 %1051
    %v1053 = vsel %vm279, %v1052, 0
    %1055 = vmatprep.subr.mxu0 0.0
    %1056 = vmatpush1.msra.mxu0 0.0
    %1057 = vmatprep.subr.mxu0 0.0
    %1058 = vmatpush1.msra.mxu0 0.0
    %1059 = vmatprep.subr.mxu0 0.0
    %1060 = vmatpush1.msra.mxu0 0.0
    %1061 = vmatprep.subr.mxu0 0.0
    %1062 = vmatpush1.msra.mxu0 0.0
    %1063 = vmatprep.subr.mxu0 0.0
    %1064 = vmatpush1.msra.mxu0 0.0
    %1065 = vmatprep.subr.mxu0 0.0
    %1066 = vmatpush1.msra.mxu0 0.0
    %1067 = vmatprep.subr.mxu0 0.0
    %1068 = vmatpush1.msra.mxu0 0.0
    %1069 = vmatprep.subr.mxu0 0.0
    %1070 = vmatpush1.msra.mxu0 0.0
    %1071 = vmatprep.subr.mxu0 0.0
    %1072 = vmatpush1.msra.mxu0 0.0
    %1073 = vmatprep.subr.mxu0 0.0
    %1074 = vmatpush1.msra.mxu0 0.0
    %1075 = vmatprep.subr.mxu0 0.0
    %1076 = vmatpush1.msra.mxu0 0.0
    %1077 = vmatprep.subr.mxu0 0.0
    %1078 = vmatpush1.msra.mxu0 0.0
    %1079 = vmatprep.subr.mxu0 0.0
    %1080 = vmatpush1.msra.mxu0 %v412
    %1081 = vmatprep.subr.mxu0 0.0
    %1082 = vmatpush1.msra.mxu0 %v411
    %1083 = vmatprep.subr.mxu0 0.0
    %1084 = vmatpush1.msra.mxu0 %v410
    %1085 = vmatprep.subr.mxu0 0.0
    %1086 = vmatpush1.msra.mxu0 %v409
    %1087 = vmatprep.subr.mxu0 0.0
    %1088 = vmatpush2.msra.mxu0 0.0
    %1089 = vmatprep.subr.mxu0 0.0
    %1090 = vmatpush2.msra.mxu0 0.0
    %1091 = vmatprep.subr.mxu0 0.0
    %1092 = vmatpush2.msra.mxu0 0.0
    %1093 = vmatprep.subr.mxu0 0.0
    %1094 = vmatpush2.msra.mxu0 0.0
    %1095 = vmatprep.subr.mxu0 0.0
    %1096 = vmatpush2.msra.mxu0 0.0
    %1097 = vmatprep.subr.mxu0 0.0
    %1098 = vmatpush2.msra.mxu0 0.0
    %1099 = vmatprep.subr.mxu0 0.0
    %1100 = vmatpush2.msra.mxu0 0.0
    %1101 = vmatprep.subr.mxu0 0.0
    %1102 = vmatpush2.msra.mxu0 0.0
    %1103 = vmatprep.subr.mxu0 0.0
    %1104 = vmatpush2.msra.mxu0 0.0
    %1105 = vmatprep.subr.mxu0 0.0
    %1106 = vmatpush2.msra.mxu0 0.0
    %1107 = vmatprep.subr.mxu0 0.0
    %1108 = vmatpush2.msra.mxu0 0.0
    %1109 = vmatprep.subr.mxu0 0.0
    %1110 = vmatpush2.msra.mxu0 0.0
    %1111 = vmatprep.subr.mxu0 0.0
    %1112 = vmatpush2.msra.mxu0 0.0
    %1113 = vmatprep.subr.mxu0 0.0
    %1114 = vmatpush2.msra.mxu0 0.0
    %1115 = vmatprep.subr.mxu0 0.0
    %1116 = vmatpush2.msra.mxu0 0.0
    %1117 = vmatprep.subr.mxu0 0.0
    %1118 = vmatpush2.msra.mxu0 0.0
    %1119 = vmatprep.mubr.f32.mxu0 0.0
    %1120 = vmatmul.mubr.f32.gmra.mxu0 %v1053
    %v1121 = vpop.f32.mrf.mxu0
    %v1122 = vadd.f32 0.0, %v1121
    %v1123 = vpop.f32.mrf.mxu0
    %1124 = vdwg.mxu0
    %v1125 = vadd.f32 %v401, %v1122
    %v1126 = vxor.u32 %v1125, 2147483648
    %v1127 = vmul.f32 %v1126, 1.442695
    %v1128 = vpow.pop %v1127
    %v1129 = vadd.f32 %v1128, 1.0
    %v1130 = vrcp.pop %v1129
    %v1131 = vmul.f32 1.0, %v1130
    %v1132 = vadd.f32 %v1122, %v500
    %1134 = vrot.lane.b32.xlu0 %v1132, 64
    %v1135 = vpop.permute.xlu0 %1134
    %v1137 = vmul.f32 %v1131, %v1135
    %1139 = vrot.lane.b32.xlu0 %v1137, 64
    %v1140 = vpop.permute.xlu0 %1139
    %v1142 = vadd.f32 %v401, %v1140
    %v1143 = vtanh.pop %v1142
    %v1144 = vsub.f32 %v1049, %v1143
    %1146 = vrot.lane.b32.xlu0 %v1144, 96
    %v1147 = vpop.permute.xlu0 %1146
    %v1149 = vmul.f32 %v1131, %v1147
    %1151 = vrot.lane.b32.xlu0 %v1149, 32
    %v1152 = vpop.permute.xlu0 %1151
    %v1154 = vadd.f32 %v1143, %v1152
    %1156 = vrot.lane.b32.xlu0 %v1154, 64
    %v1157 = vpop.permute.xlu0 %1156
    %v1158 = vsel %vm279, %v1157, 0
    %1160 = vmatprep.subr.mxu0 0.0
    %1161 = vmatpush1.msra.mxu0 0.0
    %1162 = vmatprep.subr.mxu0 0.0
    %1163 = vmatpush1.msra.mxu0 0.0
    %1164 = vmatprep.subr.mxu0 0.0
    %1165 = vmatpush1.msra.mxu0 0.0
    %1166 = vmatprep.subr.mxu0 0.0
    %1167 = vmatpush1.msra.mxu0 0.0
    %1168 = vmatprep.subr.mxu0 0.0
    %1169 = vmatpush1.msra.mxu0 0.0
    %1170 = vmatprep.subr.mxu0 0.0
    %1171 = vmatpush1.msra.mxu0 0.0
    %1172 = vmatprep.subr.mxu0 0.0
    %1173 = vmatpush1.msra.mxu0 0.0
    %1174 = vmatprep.subr.mxu0 0.0
    %1175 = vmatpush1.msra.mxu0 0.0
    %1176 = vmatprep.subr.mxu0 0.0
    %1177 = vmatpush1.msra.mxu0 0.0
    %1178 = vmatprep.subr.mxu0 0.0
    %1179 = vmatpush1.msra.mxu0 0.0
    %1180 = vmatprep.subr.mxu0 0.0
    %1181 = vmatpush1.msra.mxu0 0.0
    %1182 = vmatprep.subr.mxu0 0.0
    %1183 = vmatpush1.msra.mxu0 0.0
    %1184 = vmatprep.subr.mxu0 0.0
    %1185 = vmatpush1.msra.mxu0 %v412
    %1186 = vmatprep.subr.mxu0 0.0
    %1187 = vmatpush1.msra.mxu0 %v411
    %1188 = vmatprep.subr.mxu0 0.0
    %1189 = vmatpush1.msra.mxu0 %v410
    %1190 = vmatprep.subr.mxu0 0.0
    %1191 = vmatpush1.msra.mxu0 %v409
    %1192 = vmatprep.subr.mxu0 0.0
    %1193 = vmatpush2.msra.mxu0 0.0
    %1194 = vmatprep.subr.mxu0 0.0
    %1195 = vmatpush2.msra.mxu0 0.0
    %1196 = vmatprep.subr.mxu0 0.0
    %1197 = vmatpush2.msra.mxu0 0.0
    %1198 = vmatprep.subr.mxu0 0.0
    %1199 = vmatpush2.msra.mxu0 0.0
    %1200 = vmatprep.subr.mxu0 0.0
    %1201 = vmatpush2.msra.mxu0 0.0
    %1202 = vmatprep.subr.mxu0 0.0
    %1203 = vmatpush2.msra.mxu0 0.0
    %1204 = vmatprep.subr.mxu0 0.0
    %1205 = vmatpush2.msra.mxu0 0.0
    %1206 = vmatprep.subr.mxu0 0.0
    %1207 = vmatpush2.msra.mxu0 0.0
    %1208 = vmatprep.subr.mxu0 0.0
    %1209 = vmatpush2.msra.mxu0 0.0
    %1210 = vmatprep.subr.mxu0 0.0
    %1211 = vmatpush2.msra.mxu0 0.0
    %1212 = vmatprep.subr.mxu0 0.0
    %1213 = vmatpush2.msra.mxu0 0.0
    %1214 = vmatprep.subr.mxu0 0.0
    %1215 = vmatpush2.msra.mxu0 0.0
    %1216 = vmatprep.subr.mxu0 0.0
    %1217 = vmatpush2.msra.mxu0 0.0
    %1218 = vmatprep.subr.mxu0 0.0
    %1219 = vmatpush2.msra.mxu0 0.0
    %1220 = vmatprep.subr.mxu0 0.0
    %1221 = vmatpush2.msra.mxu0 0.0
    %1222 = vmatprep.subr.mxu0 0.0
    %1223 = vmatpush2.msra.mxu0 0.0
    %1224 = vmatprep.mubr.f32.mxu0 0.0
    %1225 = vmatmul.mubr.f32.gmra.mxu0 %v1158
    %v1226 = vpop.f32.mrf.mxu0
    %v1227 = vadd.f32 0.0, %v1226
    %v1228 = vpop.f32.mrf.mxu0
    %1229 = vdwg.mxu0
    %v1230 = vadd.f32 %v406, %v1227
    %v1231 = vxor.u32 %v1230, 2147483648
    %v1232 = vmul.f32 %v1231, 1.442695
    %v1233 = vpow.pop %v1232
    %v1234 = vadd.f32 %v1233, 1.0
    %v1235 = vrcp.pop %v1234
    %v1236 = vmul.f32 1.0, %v1235
    %v1237 = vadd.f32 %v1227, %v500
    %1239 = vrot.lane.b32.xlu0 %v1237, 64
    %v1240 = vpop.permute.xlu0 %1239
    %v1242 = vmul.f32 %v1236, %v1240
    %1244 = vrot.lane.b32.xlu0 %v1242, 64
    %v1245 = vpop.permute.xlu0 %1244
    %v1247 = vadd.f32 %v406, %v1245
    %v1248 = vtanh.pop %v1247
    %v1249 = vsub.f32 %v1154, %v1248
    %1251 = vrot.lane.b32.xlu0 %v1249, 96
    %v1252 = vpop.permute.xlu0 %1251
    %v1254 = vmul.f32 %v1236, %v1252
    %1256 = vrot.lane.b32.xlu0 %v1254, 32
    %v1257 = vpop.permute.xlu0 %1256
    %v1259 = vadd.f32 %v1248, %v1257
    %v1260 = vld [vmem:[#allocation10] sm:$0xff]
    %v1261 = vld [vmem:[#allocation10 + $0x8] sm:$0xff]
    %v1262 = vld [vmem:[#allocation10 + $0x10] sm:$0xff]
    %v1263 = vld [vmem:[#allocation10 + $0x18] sm:$0xff]
    %v1264 = vld [vmem:[#allocation11] sm:$0x1]
    %v1266 = vlaneseq
    %v1267 = vshrl.u32 %v1266, 7
    %v1268 = vsub.s32 0, %v1267
    %v1269 = vrot.slane %v1264, %v1268
    %1272 = vrot.lane.b32.xlu0 %v1259, 64
    %v1273 = vpop.permute.xlu0 %1272
    %v1274 = vsel %vm279, %v1273, 0
    %1276 = vmatprep.subr.mxu0 0.0
    %1277 = vmatpush1.msra.mxu0 0.0
    %1278 = vmatprep.subr.mxu0 0.0
    %1279 = vmatpush1.msra.mxu0 0.0
    %1280 = vmatprep.subr.mxu0 0.0
    %1281 = vmatpush1.msra.mxu0 0.0
    %1282 = vmatprep.subr.mxu0 0.0
    %1283 = vmatpush1.msra.mxu0 0.0
    %1284 = vmatprep.subr.mxu0 0.0
    %1285 = vmatpush1.msra.mxu0 0.0
    %1286 = vmatprep.subr.mxu0 0.0
    %1287 = vmatpush1.msra.mxu0 0.0
    %1288 = vmatprep.subr.mxu0 0.0
    %1289 = vmatpush1.msra.mxu0 0.0
    %1290 = vmatprep.subr.mxu0 0.0
    %1291 = vmatpush1.msra.mxu0 0.0
    %1292 = vmatprep.subr.mxu0 0.0
    %1293 = vmatpush1.msra.mxu0 0.0
    %1294 = vmatprep.subr.mxu0 0.0
    %1295 = vmatpush1.msra.mxu0 0.0
    %1296 = vmatprep.subr.mxu0 0.0
    %1297 = vmatpush1.msra.mxu0 0.0
    %1298 = vmatprep.subr.mxu0 0.0
    %1299 = vmatpush1.msra.mxu0 0.0
    %1300 = vmatprep.subr.mxu0 0.0
    %1301 = vmatpush1.msra.mxu0 %v1263
    %1302 = vmatprep.subr.mxu0 0.0
    %1303 = vmatpush1.msra.mxu0 %v1262
    %1304 = vmatprep.subr.mxu0 0.0
    %1305 = vmatpush1.msra.mxu0 %v1261
    %1306 = vmatprep.subr.mxu0 0.0
    %1307 = vmatpush1.msra.mxu0 %v1260
    %1308 = vmatprep.subr.mxu0 0.0
    %1309 = vmatpush2.msra.mxu0 0.0
    %1310 = vmatprep.subr.mxu0 0.0
    %1311 = vmatpush2.msra.mxu0 0.0
    %1312 = vmatprep.subr.mxu0 0.0
    %1313 = vmatpush2.msra.mxu0 0.0
    %1314 = vmatprep.subr.mxu0 0.0
    %1315 = vmatpush2.msra.mxu0 0.0
    %1316 = vmatprep.subr.mxu0 0.0
    %1317 = vmatpush2.msra.mxu0 0.0
    %1318 = vmatprep.subr.mxu0 0.0
    %1319 = vmatpush2.msra.mxu0 0.0
    %1320 = vmatprep.subr.mxu0 0.0
    %1321 = vmatpush2.msra.mxu0 0.0
    %1322 = vmatprep.subr.mxu0 0.0
    %1323 = vmatpush2.msra.mxu0 0.0
    %1324 = vmatprep.subr.mxu0 0.0
    %1325 = vmatpush2.msra.mxu0 0.0
    %1326 = vmatprep.subr.mxu0 0.0
    %1327 = vmatpush2.msra.mxu0 0.0
    %1328 = vmatprep.subr.mxu0 0.0
    %1329 = vmatpush2.msra.mxu0 0.0
    %1330 = vmatprep.subr.mxu0 0.0
    %1331 = vmatpush2.msra.mxu0 0.0
    %1332 = vmatprep.subr.mxu0 0.0
    %1333 = vmatpush2.msra.mxu0 0.0
    %1334 = vmatprep.subr.mxu0 0.0
    %1335 = vmatpush2.msra.mxu0 0.0
    %1336 = vmatprep.subr.mxu0 0.0
    %1337 = vmatpush2.msra.mxu0 0.0
    %1338 = vmatprep.subr.mxu0 0.0
    %1339 = vmatpush2.msra.mxu0 0.0
    %1340 = vmatprep.mubr.f32.mxu0 0.0
    %1341 = vmatmul.mubr.f32.gmra.mxu0 %v528
    %v1342 = vpop.f32.mrf.mxu0
    %v1343 = vadd.f32 %v1269, %v1342
    %v1344 = vpop.f32.mrf.mxu0
    %1345 = vmatprep.mubr.f32.mxu0 0.0
    %1346 = vmatmul.mubr.f32.gmra.mxu0 %v633
    %v1347 = vpop.f32.mrf.mxu0
    %v1348 = vadd.f32 %v1269, %v1347
    %v1349 = vpop.f32.mrf.mxu0
    %1350 = vmatprep.mubr.f32.mxu0 0.0
    %1351 = vmatmul.mubr.f32.gmra.mxu0 %v738
    %v1352 = vpop.f32.mrf.mxu0
    %v1353 = vadd.f32 %v1269, %v1352
    %v1354 = vpop.f32.mrf.mxu0
    %1355 = vmatprep.mubr.f32.mxu0 0.0
    %1356 = vmatmul.mubr.f32.gmra.mxu0 %v843
    %v1357 = vpop.f32.mrf.mxu0
    %v1358 = vadd.f32 %v1269, %v1357
    %v1359 = vpop.f32.mrf.mxu0
    %1360 = vmatprep.mubr.f32.mxu0 0.0
    %1361 = vmatmul.mubr.f32.gmra.mxu0 %v948
    %v1362 = vpop.f32.mrf.mxu0
    %v1363 = vadd.f32 %v1269, %v1362
    %v1364 = vpop.f32.mrf.mxu0
    %1365 = vmatprep.mubr.f32.mxu0 0.0
    %1366 = vmatmul.mubr.f32.gmra.mxu0 %v1053
    %v1367 = vpop.f32.mrf.mxu0
    %v1368 = vadd.f32 %v1269, %v1367
    %v1369 = vpop.f32.mrf.mxu0
    %1370 = vmatprep.mubr.f32.mxu0 0.0
    %1371 = vmatmul.mubr.f32.gmra.mxu0 %v1158
    %v1372 = vpop.f32.mrf.mxu0
    %v1373 = vadd.f32 %v1269, %v1372
    %v1374 = vpop.f32.mrf.mxu0
    %1375 = vmatprep.mubr.f32.mxu0 0.0
    %1376 = vmatmul.mubr.f32.gmra.mxu0 %v1274
    %v1377 = vpop.f32.mrf.mxu0
    %v1378 = vadd.f32 %v1269, %v1377
    %v1379 = vpop.f32.mrf.mxu0
    %1380 = vdwg.mxu0
    %v1381 = vmax.f32 %v1343, 0.0
    %v1382 = vmax.f32 %v1348, 0.0
    %v1383 = vmax.f32 %v1353, 0.0
    %v1384 = vmax.f32 %v1358, 0.0
    %v1385 = vmax.f32 %v1363, 0.0
    %v1386 = vmax.f32 %v1368, 0.0
    %v1387 = vmax.f32 %v1373, 0.0
    %v1388 = vmax.f32 %v1378, 0.0
    %v1389 = vld [vmem:[%s9] sm:$0xff]
    %v1390 = vld [vmem:[%s9 + $0x8] sm:$0xff]
    %v1391 = vld [vmem:[%s9 + $0x10] sm:$0xff]
    %v1392 = vld [vmem:[%s9 + $0x18] sm:$0xff]
    %v1393 = vld [vmem:[%s10] sm:$0x1]
    %v1395 = vlaneseq
    %v1396 = vshrl.u32 %v1395, 7
    %v1397 = vsub.s32 0, %v1396
    %v1398 = vrot.slane %v1393, %v1397
    %v1401 = vsel %vm279, %v1381, 0
    %v1404 = vsel %vm279, %v1382, 0
    %v1407 = vsel %vm279, %v1383, 0
    %v1410 = vsel %vm279, %v1384, 0
    %v1413 = vsel %vm279, %v1385, 0
    %v1416 = vsel %vm279, %v1386, 0
    %v1419 = vsel %vm279, %v1387, 0
    %v1422 = vsel %vm279, %v1388, 0
    %1424 = vmatprep.subr.mxu0 0.0
    %1425 = vmatpush1.msra.mxu0 0.0
    %1426 = vmatprep.subr.mxu0 0.0
    %1427 = vmatpush1.msra.mxu0 0.0
    %1428 = vmatprep.subr.mxu0 0.0
    %1429 = vmatpush1.msra.mxu0 0.0
    %1430 = vmatprep.subr.mxu0 0.0
    %1431 = vmatpush1.msra.mxu0 0.0
    %1432 = vmatprep.subr.mxu0 0.0
    %1433 = vmatpush1.msra.mxu0 0.0
    %1434 = vmatprep.subr.mxu0 0.0
    %1435 = vmatpush1.msra.mxu0 0.0
    %1436 = vmatprep.subr.mxu0 0.0
    %1437 = vmatpush1.msra.mxu0 0.0
    %1438 = vmatprep.subr.mxu0 0.0
    %1439 = vmatpush1.msra.mxu0 0.0
    %1440 = vmatprep.subr.mxu0 0.0
    %1441 = vmatpush1.msra.mxu0 0.0
    %1442 = vmatprep.subr.mxu0 0.0
    %1443 = vmatpush1.msra.mxu0 0.0
    %1444 = vmatprep.subr.mxu0 0.0
    %1445 = vmatpush1.msra.mxu0 0.0
    %1446 = vmatprep.subr.mxu0 0.0
    %1447 = vmatpush1.msra.mxu0 0.0
    %1448 = vmatprep.subr.mxu0 0.0
    %1449 = vmatpush1.msra.mxu0 %v1392
    %1450 = vmatprep.subr.mxu0 0.0
    %1451 = vmatpush1.msra.mxu0 %v1391
    %1452 = vmatprep.subr.mxu0 0.0
    %1453 = vmatpush1.msra.mxu0 %v1390
    %1454 = vmatprep.subr.mxu0 0.0
    %1455 = vmatpush1.msra.mxu0 %v1389
    %1456 = vmatprep.subr.mxu0 0.0
    %1457 = vmatpush2.msra.mxu0 0.0
    %1458 = vmatprep.subr.mxu0 0.0
    %1459 = vmatpush2.msra.mxu0 0.0
    %1460 = vmatprep.subr.mxu0 0.0
    %1461 = vmatpush2.msra.mxu0 0.0
    %1462 = vmatprep.subr.mxu0 0.0
    %1463 = vmatpush2.msra.mxu0 0.0
    %1464 = vmatprep.subr.mxu0 0.0
    %1465 = vmatpush2.msra.mxu0 0.0
    %1466 = vmatprep.subr.mxu0 0.0
    %1467 = vmatpush2.msra.mxu0 0.0
    %1468 = vmatprep.subr.mxu0 0.0
    %1469 = vmatpush2.msra.mxu0 0.0
    %1470 = vmatprep.subr.mxu0 0.0
    %1471 = vmatpush2.msra.mxu0 0.0
    %1472 = vmatprep.subr.mxu0 0.0
    %1473 = vmatpush2.msra.mxu0 0.0
    %1474 = vmatprep.subr.mxu0 0.0
    %1475 = vmatpush2.msra.mxu0 0.0
    %1476 = vmatprep.subr.mxu0 0.0
    %1477 = vmatpush2.msra.mxu0 0.0
    %1478 = vmatprep.subr.mxu0 0.0
    %1479 = vmatpush2.msra.mxu0 0.0
    %1480 = vmatprep.subr.mxu0 0.0
    %1481 = vmatpush2.msra.mxu0 0.0
    %1482 = vmatprep.subr.mxu0 0.0
    %1483 = vmatpush2.msra.mxu0 0.0
    %1484 = vmatprep.subr.mxu0 0.0
    %1485 = vmatpush2.msra.mxu0 0.0
    %1486 = vmatprep.subr.mxu0 0.0
    %1487 = vmatpush2.msra.mxu0 0.0
    %1488 = vmatprep.mubr.f32.mxu0 0.0
    %1489 = vmatmul.mubr.f32.gmra.mxu0 %v1401
    %v1490 = vpop.f32.mrf.mxu0
    %v1491 = vadd.f32 %v1398, %v1490
    %v1492 = vpop.f32.mrf.mxu0
    %1493 = vmatprep.mubr.f32.mxu0 0.0
    %1494 = vmatmul.mubr.f32.gmra.mxu0 %v1404
    %v1495 = vpop.f32.mrf.mxu0
    %v1496 = vadd.f32 %v1398, %v1495
    %v1497 = vpop.f32.mrf.mxu0
    %1498 = vmatprep.mubr.f32.mxu0 0.0
    %1499 = vmatmul.mubr.f32.gmra.mxu0 %v1407
    %v1500 = vpop.f32.mrf.mxu0
    %v1501 = vadd.f32 %v1398, %v1500
    %v1502 = vpop.f32.mrf.mxu0
    %1503 = vmatprep.mubr.f32.mxu0 0.0
    %1504 = vmatmul.mubr.f32.gmra.mxu0 %v1410
    %v1505 = vpop.f32.mrf.mxu0
    %v1506 = vadd.f32 %v1398, %v1505
    %v1507 = vpop.f32.mrf.mxu0
    %1508 = vmatprep.mubr.f32.mxu0 0.0
    %1509 = vmatmul.mubr.f32.gmra.mxu0 %v1413
    %v1510 = vpop.f32.mrf.mxu0
    %v1511 = vadd.f32 %v1398, %v1510
    %v1512 = vpop.f32.mrf.mxu0
    %1513 = vmatprep.mubr.f32.mxu0 0.0
    %1514 = vmatmul.mubr.f32.gmra.mxu0 %v1416
    %v1515 = vpop.f32.mrf.mxu0
    %v1516 = vadd.f32 %v1398, %v1515
    %v1517 = vpop.f32.mrf.mxu0
    %1518 = vmatprep.mubr.f32.mxu0 0.0
    %1519 = vmatmul.mubr.f32.gmra.mxu0 %v1419
    %v1520 = vpop.f32.mrf.mxu0
    %v1521 = vadd.f32 %v1398, %v1520
    %v1522 = vpop.f32.mrf.mxu0
    %1523 = vmatprep.mubr.f32.mxu0 0.0
    %1524 = vmatmul.mubr.f32.gmra.mxu0 %v1422
    %v1525 = vpop.f32.mrf.mxu0
    %v1526 = vadd.f32 %v1398, %v1525
    %v1527 = vpop.f32.mrf.mxu0
    %1528 = vdwg.mxu0
    %1529 = vst [vmem:[#allocation13] sm:$0xff] %v1491
    %1530 = vst [vmem:[#allocation13 + $0x8] sm:$0xff] %v1496
    %1531 = vst [vmem:[#allocation13 + $0x10] sm:$0xff] %v1501
    %1532 = vst [vmem:[#allocation13 + $0x18] sm:$0xff] %v1506
    %1533 = vst [vmem:[#allocation13 + $0x20] sm:$0xff] %v1511
    %1534 = vst [vmem:[#allocation13 + $0x28] sm:$0xff] %v1516
    %1535 = vst [vmem:[#allocation13 + $0x30] sm:$0xff] %v1521
    %1536 = vst [vmem:[#allocation13 + $0x38] sm:$0xff] %v1526
    // Predicated region
    $region70: #{tpu_custom_call.1} parent=1 // pred_check
      _
    $region71: #{tpu_custom_call.1} parent=1 // pred_check_branch
      %1538 = sbr.rel (0) target = $region73
    $region72: #{tpu_custom_call.1} parent=1 // pred_region
      %s1540 = ssub.s32 1024, 1024
      %1541 = vsyncadd [#allocation4], %s1540
      %s1542 = sshll.u32 [#allocation13], 4
      %s1543 = int_to_ptr.vmem [resolvable:$true] %s1542
      %1548 = dma.vmem_to_hbm [thread:$0]  %s1543, 1024, %s11, [#allocation4], 128, 128, 8
    $region73: #{tpu_custom_call.1} parent=1 // pred_fallthru
      _
    // Predicated region
    $region74: #{tpu_custom_call.1} parent=1 // pred_check
      _
    $region75: #{tpu_custom_call.1} parent=1 // pred_check_branch
      %1550 = sbr.rel (0) target = $region77
    $region76: #{tpu_custom_call.1} parent=1 // pred_region
      %1551 = dma.done [#allocation4], 1024
    $region77: #{tpu_custom_call.1} parent=1 // pred_fallthru
      _
    %1552 = vsyncpa [#allocation3], 1
    %1553 = vsyncpa [#allocation6], 1
    %1554 = vsyncpa [#allocation9], 1
    %1555 = vsyncpa [#allocation12], 1
    %1556 = vsyncpa [#allocation4], 1

</llo_original>
